<compile_context>
chip_gen: v7x
topology: tpu7x:2x2x1
jax: 0.10.0
libtpu: 0.0.40
codegen_flags: <defaults>
</compile_context>

<pallas_src>
import functools
import math

import jax
import jax.numpy as jnp
from jax import lax
from jax.experimental import pallas as pl
from jax.experimental.pallas import tpu as pltpu


# ----------------------------- in-kernel helpers -----------------------------

def _layer_norm(x, g, b, eps=1e-5):
    mu = jnp.mean(x, axis=-1, keepdims=True)
    var = jnp.mean((x - mu) ** 2, axis=-1, keepdims=True)
    return (x - mu) * lax.rsqrt(var + eps) * g + b


def _gelu_new(x):
    c = math.sqrt(2.0 / math.pi)
    return 0.5 * x * (1.0 + jnp.tanh(c * (x + 0.044715 * x * x * x)))


# ------------------------------- fused kernel --------------------------------

def fused_gpt2_kernel(z_ref, w_in_ref, wpe_ref, mask_ref,
                      wqkv_ref, wo_ref, wfc_ref, wpr_ref,
                      vecs_ref, lnf_ref,
                      o_ref, h_ref, *, n_head, seq_len):
    layer = pl.program_id(1)
    n_layer = pl.num_programs(1)
    bf16 = jnp.bfloat16
    f32 = jnp.float32

    BS, E = h_ref.shape                 # BS = BB * S rows, lane-dense E
    S = seq_len
    BB = BS // S
    H = n_head
    D = E // H

    # ---- read_in + learned position embeddings (first layer step per block) ----
    @pl.when(layer == 0)
    def _():
        z2 = z_ref[...].astype(bf16)                                   # (BS, Din)
        emb = jnp.dot(z2, w_in_ref[...], preferred_element_type=f32)   # (BS, E)
        h_ref[...] = emb + wpe_ref[...]          # wpe_ref already holds b_in + wpe, tiled BB x

    # ---- packed per-layer vectors: one DMA, static lane slices ----
    vecs = vecs_ref[0]                            # (8, 4E) f32
    ln1g, ln1b = vecs[0:1, :E], vecs[1:2, :E]
    ln2g, ln2b = vecs[2:3, :E], vecs[3:4, :E]
    bo,   bpr  = vecs[4:5, :E], vecs[5:6, :E]
    bqkv       = vecs[6:7, :3 * E]
    bfc        = vecs[7:8, :]                     # (1, 4E)

    x2 = h_ref[...]                               # (BS, E) f32 residual stream

    # ---- causal self-attention (pre-LN) ----
    xn = _layer_norm(x2, ln1g, ln1b).astype(bf16)
    qkv = jnp.dot(xn, wqkv_ref[0], preferred_element_type=f32) + bqkv  # (BS, 3E)
    qkv = qkv.reshape(BB, S, 3 * E)

    mask = mask_ref[...]                          # (S, S), 0 / -1e30
    scale = 1.0 / math.sqrt(D)
    ctx_heads = []
    for hd in range(H):
        qh = qkv[:, :, hd * D:(hd + 1) * D].astype(bf16)               # (BB, S, D)
        kh = qkv[:, :, E + hd * D:E + (hd + 1) * D].astype(bf16)
        vh = qkv[:, :, 2 * E + hd * D:2 * E + (hd + 1) * D].astype(bf16)
        s = jnp.einsum('bqd,bkd->bqk', qh, kh,
                       preferred_element_type=f32)                     # (BB, S, S)
        s = s * scale + mask
        s = s - jnp.max(s, axis=-1, keepdims=True)
        p = jnp.exp(s)
        p = p / jnp.sum(p, axis=-1, keepdims=True)
        ctx_heads.append(jnp.einsum('bqk,bkd->bqd', p.astype(bf16), vh,
                                    preferred_element_type=f32))       # (BB, S, D)
    ctx = jnp.concatenate(ctx_heads, axis=-1).reshape(BS, E).astype(bf16)
    x2 = x2 + jnp.dot(ctx, wo_ref[0], preferred_element_type=f32) + bo

    # ---- MLP (gelu_new, pre-LN) ----
    xn2 = _layer_norm(x2, ln2g, ln2b).astype(bf16)
    hmid = jnp.dot(xn2, wfc_ref[0], preferred_element_type=f32) + bfc  # (BS, 4E)
    hmid = _gelu_new(hmid).astype(bf16)
    x2 = x2 + jnp.dot(hmid, wpr_ref[0], preferred_element_type=f32) + bpr

    h_ref[...] = x2

    # ---- final LayerNorm, written once on the last layer step ----
    @pl.when(layer == n_layer - 1)
    def _():
        lnfg, lnfb = lnf_ref[0:1, :], lnf_ref[1:2, :]
        o_ref[...] = _layer_norm(x2, lnfg, lnfb)


# ------------------------------ pallas wrapper --------------------------------

def _pick_block_b(B, S):
    """BB*S ~ 256 rows (fills MXU M on v6e/v7x, >128 for v5e) while keeping
    at least 2 parallel grid blocks when the batch allows (v7x has 2 TCs)."""
    bb = max(1, min(B, 256 // max(S, 1)))
    while bb > 1 and -(-B // bb) < 2:
        bb = max(1, bb // 2)
    return bb


def fused_gpt2(zs, prep, n_head, block_b=None):
    B, S, Din = zs.shape
    E = prep["wpe_b"].shape[1]
    L = prep["wqkv"].shape[0]

    if block_b is None:
        block_b = _pick_block_b(B, S)
    nb = pl.cdiv(B, block_b)
    B_pad = nb * block_b
    if B_pad != B:
        zs = jnp.pad(zs, ((0, B_pad - B), (0, 0), (0, 0)))

    BS = block_b * S
    zs2d = zs.reshape(B_pad * S, Din)
    wpe_tiled = jnp.tile(prep["wpe_b"], (block_b, 1))                  # (BS, E)

    # additive causal mask, built once
    idx = jnp.arange(S)
    mask = jnp.where(idx[:, None] >= idx[None, :],
                     jnp.float32(0.0), jnp.float32(-1e30))             # (S, S)

    kernel = functools.partial(fused_gpt2_kernel, n_head=n_head, seq_len=S)
    out2d = pl.pallas_call(
        kernel,
        out_shape=jax.ShapeDtypeStruct((B_pad * S, E), jnp.float32),
        grid=(nb, L),
        in_specs=[
            pl.BlockSpec((BS, Din), lambda b, l: (b, 0)),              # zs (per block)
            pl.BlockSpec((Din, E), lambda b, l: (0, 0)),               # w_in (const)
            pl.BlockSpec((BS, E), lambda b, l: (0, 0)),                # b_in + wpe, tiled (const)
            pl.BlockSpec((S, S), lambda b, l: (0, 0)),                 # causal mask (const)
            pl.BlockSpec((1, E, 3 * E), lambda b, l: (l, 0, 0)),       # wqkv (per layer)
            pl.BlockSpec((1, E, E), lambda b, l: (l, 0, 0)),           # wo
            pl.BlockSpec((1, E, 4 * E), lambda b, l: (l, 0, 0)),       # wfc
            pl.BlockSpec((1, 4 * E, E), lambda b, l: (l, 0, 0)),       # wpr
            pl.BlockSpec((1, 8, 4 * E), lambda b, l: (l, 0, 0)),       # packed LN/bias vectors
            pl.BlockSpec((2, E), lambda b, l: (0, 0)),                 # ln_f gamma/beta (const)
        ],
        out_specs=pl.BlockSpec((BS, E), lambda b, l: (b, 0)),
        scratch_shapes=[pltpu.VMEM((BS, E), jnp.float32)],
        compiler_params=pltpu.CompilerParams(
            # Layer axis MUST stay innermost + sequential: the scratch carries
            # the hidden state across layers within one batch block.
            dimension_semantics=("parallel", "arbitrary")),
    )(zs2d, prep["w_in"], wpe_tiled, mask,
      prep["wqkv"], prep["wo"], prep["wfc"], prep["wpr"],
      prep["vecs"], prep["lnf"])

    return out2d.reshape(B_pad, S, E)[:B]


# --------------------------- model glue (plain JAX) ---------------------------

def combine(xs, ys):
    """Interleave xs (B,P,D) and ys (B,P) -> zs (B, 2P, D)."""
    B, P, D = xs.shape
    ys_wide = jnp.concatenate(
        [ys[..., None], jnp.zeros((B, P, D - 1), xs.dtype)], axis=2)
    zs = jnp.stack([xs, ys_wide], axis=2).reshape(B, 2 * P, D)
    return zs


def prepare_params(params, S):
    """Stack per-layer params, cast matmul weights to bf16 (MXU operands) and
    pack the small per-layer vectors into ONE lane-dense (L, 8, 4E) f32 array.
    Done once, outside the kernel."""
    E = params["w_in"].shape[1]
    L = len(params["layers"])
    bf = jnp.bfloat16

    def stack(i):
        return jnp.stack([lp[i] for lp in params["layers"]], axis=0)

    ln1g, ln1b = stack(0), stack(1)           # (L, 1, E)
    wqkv, bqkv = stack(2), stack(3)           # (L, E, 3E), (L, 1, 3E)
    wo, bo = stack(4), stack(5)               # (L, E, E), (L, 1, E)
    ln2g, ln2b = stack(6), stack(7)
    wfc, bfc = stack(8), stack(9)             # (L, E, 4E), (L, 1, 4E)
    wpr, bpr = stack(10), stack(11)           # (L, 4E, E), (L, 1, E)

    W = 4 * E

    def pad_row(v):                            # (L, 1, k) -> (L, 1, 4E)
        return jnp.pad(v, ((0, 0), (0, 0), (0, W - v.shape[-1])))

    vecs = jnp.concatenate(
        [pad_row(ln1g), pad_row(ln1b), pad_row(ln2g), pad_row(ln2b),
         pad_row(bo), pad_row(bpr), pad_row(bqkv), pad_row(bfc)],
        axis=1).astype(jnp.float32)            # (L, 8, 4E)

    return dict(
        w_in=params["w_in"].astype(bf),
        wpe_b=(params["wpe"][:S] + params["b_in"]).astype(jnp.float32),  # (S, E)
        wqkv=wqkv.astype(bf), wo=wo.astype(bf),
        wfc=wfc.astype(bf), wpr=wpr.astype(bf),
        vecs=vecs,
        lnf=jnp.concatenate([params["lnf_g"], params["lnf_b"]], axis=0),  # (2, E)
    )


def transformer_forward(xs, ys, params, n_head, inds=None):
    if inds is None:
        inds = jnp.arange(ys.shape[1])
    zs = combine(xs, ys)                                    # (B, 2P, Din)
    S = zs.shape[1]
    prep = prepare_params(params, S)
    hidden = fused_gpt2(zs, prep, n_head)                   # (B, S, E) post ln_f
    # read_out: trivial E->1 projection + strided/index selection in plain JAX.
    pred = hidden @ params["w_out"] + params["b_out"]       # (B, S, 1)
    return pred[:, ::2, 0][:, inds]


def init_params(key, n_dims, n_positions, n_embd, n_layer):
    E = n_embd
    keys = jax.random.split(key, 4 + 4 * n_layer)
    std = 0.02

    def nrm(k, shape):
        return std * jax.random.normal(k, shape, dtype=jnp.float32)

    params = {
        "w_in": nrm(keys[0], (n_dims, E)),
        "b_in": jnp.zeros((1, E), jnp.float32),
        "wpe": nrm(keys[1], (2 * n_positions, E)),
        "lnf_g": jnp.ones((1, E), jnp.float32),
        "lnf_b": jnp.zeros((1, E), jnp.float32),
        "w_out": nrm(keys[2], (E, 1)),
        "b_out": jnp.zeros((1, 1), jnp.float32),
        "layers": [],
    }
    for l in range(n_layer):
        k0, k1, k2, k3 = keys[4 + 4 * l:4 + 4 * (l + 1)]
        layer = (
            jnp.ones((1, E), jnp.float32),   # ln1 gamma
            jnp.zeros((1, E), jnp.float32),  # ln1 beta
            nrm(k0, (E, 3 * E)),             # c_attn weight  (Conv1D: in,out)
            jnp.zeros((1, 3 * E), jnp.float32),
            nrm(k1, (E, E)),                 # attn c_proj weight
            jnp.zeros((1, E), jnp.float32),
            jnp.ones((1, E), jnp.float32),   # ln2 gamma
            jnp.zeros((1, E), jnp.float32),  # ln2 beta
            nrm(k2, (E, 4 * E)),             # mlp c_fc
            jnp.zeros((1, 4 * E), jnp.float32),
            nrm(k3, (4 * E, E)),             # mlp c_proj
            jnp.zeros((1, E), jnp.float32),
        )
        params["layers"].append(layer)
    return params


if __name__ == "__main__":
    # Small shapes consistent with the module (n_embd=128 is the module default
    # and keeps the lane axis dense).
    B, points, n_dims = 2, 8, 4
    n_embd, n_layer, n_head = 128, 2, 4
    n_positions = points  # GPT2Config(n_positions=2*n_positions) covers seq = 2*points

    key = jax.random.PRNGKey(0)
    kx, ky, kp = jax.random.split(key, 3)
    xs = jax.random.normal(kx, (B, points, n_dims), dtype=jnp.float32)
    ys = jax.random.normal(ky, (B, points), dtype=jnp.float32)

    params = init_params(kp, n_dims, n_positions, n_embd, n_layer)

    preds = transformer_forward(xs, ys, params, n_head)   # (B, points)
    jax.block_until_ready(preds)
    assert preds.shape == (B, points)
    assert bool(jnp.all(jnp.isfinite(preds)))
    print("KERNEL_OK")
</pallas_src>

<mosaic_0001>
module attributes {stable_mosaic.version = 11 : i64} {
  func.func @fused_gpt2_kernel(%arg0: i32, %arg1: i32, %arg2: memref<16x4xf32, #tpu.memory_space<vmem>>, %arg3: memref<4x128xbf16, #tpu.memory_space<vmem>>, %arg4: memref<16x128xf32, #tpu.memory_space<vmem>>, %arg5: memref<16x16xf32, #tpu.memory_space<vmem>>, %arg6: memref<1x128x384xbf16, #tpu.memory_space<vmem>>, %arg7: memref<1x128x128xbf16, #tpu.memory_space<vmem>>, %arg8: memref<1x128x512xbf16, #tpu.memory_space<vmem>>, %arg9: memref<1x512x128xbf16, #tpu.memory_space<vmem>>, %arg10: memref<1x8x512xf32, #tpu.memory_space<vmem>>, %arg11: memref<2x128xf32, #tpu.memory_space<vmem>>, %arg12: memref<16x128xf32, #tpu.memory_space<vmem>>, %arg13: memref<16x128xf32, #tpu.memory_space<vmem>>) attributes {dimension_semantics = [#tpu.dimension_semantics<parallel>, #tpu.dimension_semantics<arbitrary>], iteration_bounds = array<i64: 2, 2>, scalar_prefetch = 0 : i64, scratch_operands = 1 : i64, tpu.core_type = #tpu.core_type<tc>, window_params = [{transform_indices = @transform_0, window_bounds = array<i64: 16, 4>}, {pipeline_mode = #tpu.pipeline_mode<synchronous>, transform_indices = @transform_1, window_bounds = array<i64: 4, 128>}, {pipeline_mode = #tpu.pipeline_mode<synchronous>, transform_indices = @transform_2, window_bounds = array<i64: 16, 128>}, {pipeline_mode = #tpu.pipeline_mode<synchronous>, transform_indices = @transform_3, window_bounds = array<i64: 16, 16>}, {transform_indices = @transform_4, window_bounds = array<i64: 1, 128, 384>}, {transform_indices = @transform_5, window_bounds = array<i64: 1, 128, 128>}, {transform_indices = @transform_6, window_bounds = array<i64: 1, 128, 512>}, {transform_indices = @transform_7, window_bounds = array<i64: 1, 512, 128>}, {transform_indices = @transform_8, window_bounds = array<i64: 1, 8, 512>}, {pipeline_mode = #tpu.pipeline_mode<synchronous>, transform_indices = @transform_9, window_bounds = array<i64: 2, 128>}, {transform_indices = @transform_10, window_bounds = array<i64: 16, 128>}]} {
    %c0_i32 = arith.constant 0 : i32
    %0 = arith.cmpi eq, %arg1, %c0_i32 : i32
    %1 = arith.extui %0 : i1 to i32
    %c0_i32_0 = arith.constant 0 : i32
    %2 = arith.cmpi ne, %1, %c0_i32_0 : i32
    scf.if %2 {
      %c0_59 = arith.constant 0 : index
      %c0_60 = arith.constant 0 : index
      %193 = vector.load %arg2[%c0_59, %c0_60] : memref<16x4xf32, #tpu.memory_space<vmem>>, vector<16x4xf32>
      %194 = arith.truncf %193 : vector<16x4xf32> to vector<16x4xbf16>
      %c0_61 = arith.constant 0 : index
      %c0_62 = arith.constant 0 : index
      %195 = vector.load %arg3[%c0_61, %c0_62] : memref<4x128xbf16, #tpu.memory_space<vmem>>, vector<4x128xbf16>
      %cst_63 = arith.constant dense<0.000000e+00> : vector<16x128xf32>
      %196 = tpu.matmul %194, %195, %cst_63 {dimension_numbers = #tpu.dot_dimension_numbers<[1], [0], [0], [1], [0, 0, 1, 1], [], []>} : vector<16x4xbf16>, vector<4x128xbf16>, vector<16x128xf32> -> vector<16x128xf32>
      %c0_64 = arith.constant 0 : index
      %c0_65 = arith.constant 0 : index
      %197 = vector.load %arg4[%c0_64, %c0_65] : memref<16x128xf32, #tpu.memory_space<vmem>>, vector<16x128xf32>
      %198 = arith.addf %196, %197 : vector<16x128xf32>
      %c0_66 = arith.constant 0 : index
      %c0_67 = arith.constant 0 : index
      %199 = vector.load %arg13[%c0_66, %c0_67] : memref<16x128xf32, #tpu.memory_space<vmem>>, vector<16x128xf32>
      tpu.vector_store %arg13[%c0_66, %c0_67], %198 {strides = array<i32>} : memref<16x128xf32, #tpu.memory_space<vmem>>, vector<16x128xf32>,
    } else {
    }
    %c0 = arith.constant 0 : index
    %c0_1 = arith.constant 0 : index
    %c0_2 = arith.constant 0 : index
    %3 = vector.load %arg10[%c0, %c0_1, %c0_2] : memref<1x8x512xf32, #tpu.memory_space<vmem>>, vector<1x8x512xf32>
    %4 = vector.shape_cast %3 : vector<1x8x512xf32> to vector<8x512xf32>
    %5 = vector.extract_strided_slice %4 {offsets = [0, 0], sizes = [1, 128], strides = [1, 1]} : vector<8x512xf32> to vector<1x128xf32>
    %6 = vector.extract_strided_slice %4 {offsets = [1, 0], sizes = [1, 128], strides = [1, 1]} : vector<8x512xf32> to vector<1x128xf32>
    %7 = vector.extract_strided_slice %4 {offsets = [2, 0], sizes = [1, 128], strides = [1, 1]} : vector<8x512xf32> to vector<1x128xf32>
    %8 = vector.extract_strided_slice %4 {offsets = [3, 0], sizes = [1, 128], strides = [1, 1]} : vector<8x512xf32> to vector<1x128xf32>
    %9 = vector.extract_strided_slice %4 {offsets = [4, 0], sizes = [1, 128], strides = [1, 1]} : vector<8x512xf32> to vector<1x128xf32>
    %10 = vector.extract_strided_slice %4 {offsets = [5, 0], sizes = [1, 128], strides = [1, 1]} : vector<8x512xf32> to vector<1x128xf32>
    %11 = vector.extract_strided_slice %4 {offsets = [6, 0], sizes = [1, 384], strides = [1, 1]} : vector<8x512xf32> to vector<1x384xf32>
    %12 = vector.extract_strided_slice %4 {offsets = [7, 0], sizes = [1, 512], strides = [1, 1]} : vector<8x512xf32> to vector<1x512xf32>
    %c0_3 = arith.constant 0 : index
    %c0_4 = arith.constant 0 : index
    %13 = vector.load %arg13[%c0_3, %c0_4] : memref<16x128xf32, #tpu.memory_space<vmem>>, vector<16x128xf32>
    %cst = arith.constant dense<0.000000e+00> : vector<16xf32>
    %14 = vector.multi_reduction <add>, %13, %cst [1] : vector<16x128xf32> to vector<16xf32>
    %15 = vector.shape_cast %14 : vector<16xf32> to vector<16x1xf32>
    %cst_5 = arith.constant 1.280000e+02 : f32
    %16 = vector.broadcast %cst_5 : f32 to vector<16x1xf32>
    %17 = arith.divf %15, %16 : vector<16x1xf32>
    %18 = vector.broadcast %17 : vector<16x1xf32> to vector<16x128xf32>
    %19 = arith.subf %13, %18 : vector<16x128xf32>
    %20 = arith.mulf %19, %19 : vector<16x128xf32>
    %cst_6 = arith.constant dense<0.000000e+00> : vector<16xf32>
    %21 = vector.multi_reduction <add>, %20, %cst_6 [1] : vector<16x128xf32> to vector<16xf32>
    %22 = vector.shape_cast %21 : vector<16xf32> to vector<16x1xf32>
    %cst_7 = arith.constant 1.280000e+02 : f32
    %23 = vector.broadcast %cst_7 : f32 to vector<16x1xf32>
    %24 = arith.divf %22, %23 : vector<16x1xf32>
    %25 = vector.broadcast %17 : vector<16x1xf32> to vector<16x128xf32>
    %26 = arith.subf %13, %25 : vector<16x128xf32>
    %cst_8 = arith.constant 9.99999974E-6 : f32
    %27 = vector.broadcast %cst_8 : f32 to vector<16x1xf32>
    %28 = arith.addf %24, %27 : vector<16x1xf32>
    %29 = math.rsqrt %28 : vector<16x1xf32>
    %30 = vector.broadcast %29 : vector<16x1xf32> to vector<16x128xf32>
    %31 = arith.mulf %26, %30 : vector<16x128xf32>
    %32 = vector.broadcast %5 : vector<1x128xf32> to vector<16x128xf32>
    %33 = arith.mulf %31, %32 : vector<16x128xf32>
    %34 = vector.broadcast %6 : vector<1x128xf32> to vector<16x128xf32>
    %35 = arith.addf %33, %34 : vector<16x128xf32>
    %36 = arith.truncf %35 : vector<16x128xf32> to vector<16x128xbf16>
    %c0_9 = arith.constant 0 : index
    %c0_10 = arith.constant 0 : index
    %c0_11 = arith.constant 0 : index
    %37 = vector.load %arg6[%c0_9, %c0_10, %c0_11] : memref<1x128x384xbf16, #tpu.memory_space<vmem>>, vector<1x128x384xbf16>
    %38 = vector.shape_cast %37 : vector<1x128x384xbf16> to vector<128x384xbf16>
    %cst_12 = arith.constant dense<0.000000e+00> : vector<16x384xf32>
    %39 = tpu.matmul %36, %38, %cst_12 {dimension_numbers = #tpu.dot_dimension_numbers<[1], [0], [0], [1], [0, 0, 1, 1], [], []>} : vector<16x128xbf16>, vector<128x384xbf16>, vector<16x384xf32> -> vector<16x384xf32>
    %40 = vector.broadcast %11 : vector<1x384xf32> to vector<16x384xf32>
    %41 = arith.addf %39, %40 : vector<16x384xf32>
    %42 = vector.shape_cast %41 : vector<16x384xf32> to vector<1x16x384xf32>
    %c0_13 = arith.constant 0 : index
    %c0_14 = arith.constant 0 : index
    %43 = vector.load %arg5[%c0_13, %c0_14] : memref<16x16xf32, #tpu.memory_space<vmem>>, vector<16x16xf32>
    %44 = vector.extract_strided_slice %42 {offsets = [0, 0, 0], sizes = [1, 16, 32], strides = [1, 1, 1]} : vector<1x16x384xf32> to vector<1x16x32xf32>
    %45 = arith.truncf %44 : vector<1x16x32xf32> to vector<1x16x32xbf16>
    %46 = vector.extract_strided_slice %42 {offsets = [0, 0, 128], sizes = [1, 16, 32], strides = [1, 1, 1]} : vector<1x16x384xf32> to vector<1x16x32xf32>
    %47 = arith.truncf %46 : vector<1x16x32xf32> to vector<1x16x32xbf16>
    %48 = vector.extract_strided_slice %42 {offsets = [0, 0, 256], sizes = [1, 16, 32], strides = [1, 1, 1]} : vector<1x16x384xf32> to vector<1x16x32xf32>
    %49 = arith.truncf %48 : vector<1x16x32xf32> to vector<1x16x32xbf16>
    "tpu.trace_start"() <{level = 10 : i32, message = "bqd,bkd->bqk"}> : () -> ()
    %cst_15 = arith.constant dense<0.000000e+00> : vector<1x16x16xf32>
    %50 = tpu.matmul %45, %47, %cst_15 {dimension_numbers = #tpu.dot_dimension_numbers<[2], [2], [1], [1], [0, 0, 0, 1, 1, 1], [0], [0]>} : vector<1x16x32xbf16>, vector<1x16x32xbf16>, vector<1x16x16xf32> -> vector<1x16x16xf32>
    "tpu.trace_stop"() : () -> ()
    %cst_16 = arith.constant 0.176776692 : f32
    %51 = vector.broadcast %cst_16 : f32 to vector<1x16x16xf32>
    %52 = arith.mulf %50, %51 : vector<1x16x16xf32>
    %53 = vector.shape_cast %43 : vector<16x16xf32> to vector<1x16x16xf32>
    %54 = arith.addf %52, %53 : vector<1x16x16xf32>
    %cst_17 = arith.constant dense<0xFF800000> : vector<1x16xf32>
    %55 = vector.multi_reduction <maximumf>, %54, %cst_17 [2] : vector<1x16x16xf32> to vector<1x16xf32>
    %56 = vector.shape_cast %55 : vector<1x16xf32> to vector<1x16x1xf32>
    %57 = vector.broadcast %56 : vector<1x16x1xf32> to vector<1x16x16xf32>
    %58 = arith.subf %54, %57 : vector<1x16x16xf32>
    %59 = math.exp %58 : vector<1x16x16xf32>
    %cst_18 = arith.constant dense<0.000000e+00> : vector<1x16xf32>
    %60 = vector.multi_reduction <add>, %59, %cst_18 [2] : vector<1x16x16xf32> to vector<1x16xf32>
    %61 = vector.shape_cast %60 : vector<1x16xf32> to vector<1x16x1xf32>
    %62 = vector.broadcast %61 : vector<1x16x1xf32> to vector<1x16x16xf32>
    %63 = arith.divf %59, %62 : vector<1x16x16xf32>
    %64 = arith.truncf %63 : vector<1x16x16xf32> to vector<1x16x16xbf16>
    "tpu.trace_start"() <{level = 10 : i32, message = "bqk,bkd->bqd"}> : () -> ()
    %cst_19 = arith.constant dense<0.000000e+00> : vector<1x16x32xf32>
    %65 = tpu.matmul %64, %49, %cst_19 {dimension_numbers = #tpu.dot_dimension_numbers<[2], [1], [1], [2], [0, 0, 0, 1, 1, 2], [0], [0]>} : vector<1x16x16xbf16>, vector<1x16x32xbf16>, vector<1x16x32xf32> -> vector<1x16x32xf32>
    "tpu.trace_stop"() : () -> ()
    %66 = vector.extract_strided_slice %42 {offsets = [0, 0, 32], sizes = [1, 16, 32], strides = [1, 1, 1]} : vector<1x16x384xf32> to vector<1x16x32xf32>
    %67 = arith.truncf %66 : vector<1x16x32xf32> to vector<1x16x32xbf16>
    %68 = vector.extract_strided_slice %42 {offsets = [0, 0, 160], sizes = [1, 16, 32], strides = [1, 1, 1]} : vector<1x16x384xf32> to vector<1x16x32xf32>
    %69 = arith.truncf %68 : vector<1x16x32xf32> to vector<1x16x32xbf16>
    %70 = vector.extract_strided_slice %42 {offsets = [0, 0, 288], sizes = [1, 16, 32], strides = [1, 1, 1]} : vector<1x16x384xf32> to vector<1x16x32xf32>
    %71 = arith.truncf %70 : vector<1x16x32xf32> to vector<1x16x32xbf16>
    "tpu.trace_start"() <{level = 10 : i32, message = "bqd,bkd->bqk"}> : () -> ()
    %cst_20 = arith.constant dense<0.000000e+00> : vector<1x16x16xf32>
    %72 = tpu.matmul %67, %69, %cst_20 {dimension_numbers = #tpu.dot_dimension_numbers<[2], [2], [1], [1], [0, 0, 0, 1, 1, 1], [0], [0]>} : vector<1x16x32xbf16>, vector<1x16x32xbf16>, vector<1x16x16xf32> -> vector<1x16x16xf32>
    "tpu.trace_stop"() : () -> ()
    %cst_21 = arith.constant 0.176776692 : f32
    %73 = vector.broadcast %cst_21 : f32 to vector<1x16x16xf32>
    %74 = arith.mulf %72, %73 : vector<1x16x16xf32>
    %75 = vector.shape_cast %43 : vector<16x16xf32> to vector<1x16x16xf32>
    %76 = arith.addf %74, %75 : vector<1x16x16xf32>
    %cst_22 = arith.constant dense<0xFF800000> : vector<1x16xf32>
    %77 = vector.multi_reduction <maximumf>, %76, %cst_22 [2] : vector<1x16x16xf32> to vector<1x16xf32>
    %78 = vector.shape_cast %77 : vector<1x16xf32> to vector<1x16x1xf32>
    %79 = vector.broadcast %78 : vector<1x16x1xf32> to vector<1x16x16xf32>
    %80 = arith.subf %76, %79 : vector<1x16x16xf32>
    %81 = math.exp %80 : vector<1x16x16xf32>
    %cst_23 = arith.constant dense<0.000000e+00> : vector<1x16xf32>
    %82 = vector.multi_reduction <add>, %81, %cst_23 [2] : vector<1x16x16xf32> to vector<1x16xf32>
    %83 = vector.shape_cast %82 : vector<1x16xf32> to vector<1x16x1xf32>
    %84 = vector.broadcast %83 : vector<1x16x1xf32> to vector<1x16x16xf32>
    %85 = arith.divf %81, %84 : vector<1x16x16xf32>
    %86 = arith.truncf %85 : vector<1x16x16xf32> to vector<1x16x16xbf16>
    "tpu.trace_start"() <{level = 10 : i32, message = "bqk,bkd->bqd"}> : () -> ()
    %cst_24 = arith.constant dense<0.000000e+00> : vector<1x16x32xf32>
    %87 = tpu.matmul %86, %71, %cst_24 {dimension_numbers = #tpu.dot_dimension_numbers<[2], [1], [1], [2], [0, 0, 0, 1, 1, 2], [0], [0]>} : vector<1x16x16xbf16>, vector<1x16x32xbf16>, vector<1x16x32xf32> -> vector<1x16x32xf32>
    "tpu.trace_stop"() : () -> ()
    %88 = vector.extract_strided_slice %42 {offsets = [0, 0, 64], sizes = [1, 16, 32], strides = [1, 1, 1]} : vector<1x16x384xf32> to vector<1x16x32xf32>
    %89 = arith.truncf %88 : vector<1x16x32xf32> to vector<1x16x32xbf16>
    %90 = vector.extract_strided_slice %42 {offsets = [0, 0, 192], sizes = [1, 16, 32], strides = [1, 1, 1]} : vector<1x16x384xf32> to vector<1x16x32xf32>
    %91 = arith.truncf %90 : vector<1x16x32xf32> to vector<1x16x32xbf16>
    %92 = vector.extract_strided_slice %42 {offsets = [0, 0, 320], sizes = [1, 16, 32], strides = [1, 1, 1]} : vector<1x16x384xf32> to vector<1x16x32xf32>
    %93 = arith.truncf %92 : vector<1x16x32xf32> to vector<1x16x32xbf16>
    "tpu.trace_start"() <{level = 10 : i32, message = "bqd,bkd->bqk"}> : () -> ()
    %cst_25 = arith.constant dense<0.000000e+00> : vector<1x16x16xf32>
    %94 = tpu.matmul %89, %91, %cst_25 {dimension_numbers = #tpu.dot_dimension_numbers<[2], [2], [1], [1], [0, 0, 0, 1, 1, 1], [0], [0]>} : vector<1x16x32xbf16>, vector<1x16x32xbf16>, vector<1x16x16xf32> -> vector<1x16x16xf32>
    "tpu.trace_stop"() : () -> ()
    %cst_26 = arith.constant 0.176776692 : f32
    %95 = vector.broadcast %cst_26 : f32 to vector<1x16x16xf32>
    %96 = arith.mulf %94, %95 : vector<1x16x16xf32>
    %97 = vector.shape_cast %43 : vector<16x16xf32> to vector<1x16x16xf32>
    %98 = arith.addf %96, %97 : vector<1x16x16xf32>
    %cst_27 = arith.constant dense<0xFF800000> : vector<1x16xf32>
    %99 = vector.multi_reduction <maximumf>, %98, %cst_27 [2] : vector<1x16x16xf32> to vector<1x16xf32>
    %100 = vector.shape_cast %99 : vector<1x16xf32> to vector<1x16x1xf32>
    %101 = vector.broadcast %100 : vector<1x16x1xf32> to vector<1x16x16xf32>
    %102 = arith.subf %98, %101 : vector<1x16x16xf32>
    %103 = math.exp %102 : vector<1x16x16xf32>
    %cst_28 = arith.constant dense<0.000000e+00> : vector<1x16xf32>
    %104 = vector.multi_reduction <add>, %103, %cst_28 [2] : vector<1x16x16xf32> to vector<1x16xf32>
    %105 = vector.shape_cast %104 : vector<1x16xf32> to vector<1x16x1xf32>
    %106 = vector.broadcast %105 : vector<1x16x1xf32> to vector<1x16x16xf32>
    %107 = arith.divf %103, %106 : vector<1x16x16xf32>
    %108 = arith.truncf %107 : vector<1x16x16xf32> to vector<1x16x16xbf16>
    "tpu.trace_start"() <{level = 10 : i32, message = "bqk,bkd->bqd"}> : () -> ()
    %cst_29 = arith.constant dense<0.000000e+00> : vector<1x16x32xf32>
    %109 = tpu.matmul %108, %93, %cst_29 {dimension_numbers = #tpu.dot_dimension_numbers<[2], [1], [1], [2], [0, 0, 0, 1, 1, 2], [0], [0]>} : vector<1x16x16xbf16>, vector<1x16x32xbf16>, vector<1x16x32xf32> -> vector<1x16x32xf32>
    "tpu.trace_stop"() : () -> ()
    %110 = vector.extract_strided_slice %42 {offsets = [0, 0, 96], sizes = [1, 16, 32], strides = [1, 1, 1]} : vector<1x16x384xf32> to vector<1x16x32xf32>
    %111 = arith.truncf %110 : vector<1x16x32xf32> to vector<1x16x32xbf16>
    %112 = vector.extract_strided_slice %42 {offsets = [0, 0, 224], sizes = [1, 16, 32], strides = [1, 1, 1]} : vector<1x16x384xf32> to vector<1x16x32xf32>
    %113 = arith.truncf %112 : vector<1x16x32xf32> to vector<1x16x32xbf16>
    %114 = vector.extract_strided_slice %42 {offsets = [0, 0, 352], sizes = [1, 16, 32], strides = [1, 1, 1]} : vector<1x16x384xf32> to vector<1x16x32xf32>
    %115 = arith.truncf %114 : vector<1x16x32xf32> to vector<1x16x32xbf16>
    "tpu.trace_start"() <{level = 10 : i32, message = "bqd,bkd->bqk"}> : () -> ()
    %cst_30 = arith.constant dense<0.000000e+00> : vector<1x16x16xf32>
    %116 = tpu.matmul %111, %113, %cst_30 {dimension_numbers = #tpu.dot_dimension_numbers<[2], [2], [1], [1], [0, 0, 0, 1, 1, 1], [0], [0]>} : vector<1x16x32xbf16>, vector<1x16x32xbf16>, vector<1x16x16xf32> -> vector<1x16x16xf32>
    "tpu.trace_stop"() : () -> ()
    %cst_31 = arith.constant 0.176776692 : f32
    %117 = vector.broadcast %cst_31 : f32 to vector<1x16x16xf32>
    %118 = arith.mulf %116, %117 : vector<1x16x16xf32>
    %119 = vector.shape_cast %43 : vector<16x16xf32> to vector<1x16x16xf32>
    %120 = arith.addf %118, %119 : vector<1x16x16xf32>
    %cst_32 = arith.constant dense<0xFF800000> : vector<1x16xf32>
    %121 = vector.multi_reduction <maximumf>, %120, %cst_32 [2] : vector<1x16x16xf32> to vector<1x16xf32>
    %122 = vector.shape_cast %121 : vector<1x16xf32> to vector<1x16x1xf32>
    %123 = vector.broadcast %122 : vector<1x16x1xf32> to vector<1x16x16xf32>
    %124 = arith.subf %120, %123 : vector<1x16x16xf32>
    %125 = math.exp %124 : vector<1x16x16xf32>
    %cst_33 = arith.constant dense<0.000000e+00> : vector<1x16xf32>
    %126 = vector.multi_reduction <add>, %125, %cst_33 [2] : vector<1x16x16xf32> to vector<1x16xf32>
    %127 = vector.shape_cast %126 : vector<1x16xf32> to vector<1x16x1xf32>
    %128 = vector.broadcast %127 : vector<1x16x1xf32> to vector<1x16x16xf32>
    %129 = arith.divf %125, %128 : vector<1x16x16xf32>
    %130 = arith.truncf %129 : vector<1x16x16xf32> to vector<1x16x16xbf16>
    "tpu.trace_start"() <{level = 10 : i32, message = "bqk,bkd->bqd"}> : () -> ()
    %cst_34 = arith.constant dense<0.000000e+00> : vector<1x16x32xf32>
    %131 = tpu.matmul %130, %115, %cst_34 {dimension_numbers = #tpu.dot_dimension_numbers<[2], [1], [1], [2], [0, 0, 0, 1, 1, 2], [0], [0]>} : vector<1x16x16xbf16>, vector<1x16x32xbf16>, vector<1x16x32xf32> -> vector<1x16x32xf32>
    "tpu.trace_stop"() : () -> ()
    %132 = tpu.concatenate %65, %87, %109, %131 in 2 : vector<1x16x32xf32>, vector<1x16x32xf32>, vector<1x16x32xf32>, vector<1x16x32xf32> -> vector<1x16x128xf32>
    %133 = vector.shape_cast %132 : vector<1x16x128xf32> to vector<16x128xf32>
    %134 = arith.truncf %133 : vector<16x128xf32> to vector<16x128xbf16>
    %c0_35 = arith.constant 0 : index
    %c0_36 = arith.constant 0 : index
    %c0_37 = arith.constant 0 : index
    %135 = vector.load %arg7[%c0_35, %c0_36, %c0_37] : memref<1x128x128xbf16, #tpu.memory_space<vmem>>, vector<1x128x128xbf16>
    %136 = vector.shape_cast %135 : vector<1x128x128xbf16> to vector<128x128xbf16>
    %cst_38 = arith.constant dense<0.000000e+00> : vector<16x128xf32>
    %137 = tpu.matmul %134, %136, %cst_38 {dimension_numbers = #tpu.dot_dimension_numbers<[1], [0], [0], [1], [0, 0, 1, 1], [], []>} : vector<16x128xbf16>, vector<128x128xbf16>, vector<16x128xf32> -> vector<16x128xf32>
    %138 = arith.addf %13, %137 : vector<16x128xf32>
    %139 = vector.broadcast %9 : vector<1x128xf32> to vector<16x128xf32>
    %140 = arith.addf %138, %139 : vector<16x128xf32>
    %cst_39 = arith.constant dense<0.000000e+00> : vector<16xf32>
    %141 = vector.multi_reduction <add>, %140, %cst_39 [1] : vector<16x128xf32> to vector<16xf32>
    %142 = vector.shape_cast %141 : vector<16xf32> to vector<16x1xf32>
    %cst_40 = arith.constant 1.280000e+02 : f32
    %143 = vector.broadcast %cst_40 : f32 to vector<16x1xf32>
    %144 = arith.divf %142, %143 : vector<16x1xf32>
    %145 = vector.broadcast %144 : vector<16x1xf32> to vector<16x128xf32>
    %146 = arith.subf %140, %145 : vector<16x128xf32>
    %147 = arith.mulf %146, %146 : vector<16x128xf32>
    %cst_41 = arith.constant dense<0.000000e+00> : vector<16xf32>
    %148 = vector.multi_reduction <add>, %147, %cst_41 [1] : vector<16x128xf32> to vector<16xf32>
    %149 = vector.shape_cast %148 : vector<16xf32> to vector<16x1xf32>
    %cst_42 = arith.constant 1.280000e+02 : f32
    %150 = vector.broadcast %cst_42 : f32 to vector<16x1xf32>
    %151 = arith.divf %149, %150 : vector<16x1xf32>
    %152 = vector.broadcast %144 : vector<16x1xf32> to vector<16x128xf32>
    %153 = arith.subf %140, %152 : vector<16x128xf32>
    %cst_43 = arith.constant 9.99999974E-6 : f32
    %154 = vector.broadcast %cst_43 : f32 to vector<16x1xf32>
    %155 = arith.addf %151, %154 : vector<16x1xf32>
    %156 = math.rsqrt %155 : vector<16x1xf32>
    %157 = vector.broadcast %156 : vector<16x1xf32> to vector<16x128xf32>
    %158 = arith.mulf %153, %157 : vector<16x128xf32>
    %159 = vector.broadcast %7 : vector<1x128xf32> to vector<16x128xf32>
    %160 = arith.mulf %158, %159 : vector<16x128xf32>
    %161 = vector.broadcast %8 : vector<1x128xf32> to vector<16x128xf32>
    %162 = arith.addf %160, %161 : vector<16x128xf32>
    %163 = arith.truncf %162 : vector<16x128xf32> to vector<16x128xbf16>
    %c0_44 = arith.constant 0 : index
    %c0_45 = arith.constant 0 : index
    %c0_46 = arith.constant 0 : index
    %164 = vector.load %arg8[%c0_44, %c0_45, %c0_46] : memref<1x128x512xbf16, #tpu.memory_space<vmem>>, vector<1x128x512xbf16>
    %165 = vector.shape_cast %164 : vector<1x128x512xbf16> to vector<128x512xbf16>
    %cst_47 = arith.constant dense<0.000000e+00> : vector<16x512xf32>
    %166 = tpu.matmul %163, %165, %cst_47 {dimension_numbers = #tpu.dot_dimension_numbers<[1], [0], [0], [1], [0, 0, 1, 1], [], []>} : vector<16x128xbf16>, vector<128x512xbf16>, vector<16x512xf32> -> vector<16x512xf32>
    %167 = vector.broadcast %12 : vector<1x512xf32> to vector<16x512xf32>
    %168 = arith.addf %166, %167 : vector<16x512xf32>
    %cst_48 = arith.constant 5.000000e-01 : f32
    %169 = vector.broadcast %cst_48 : f32 to vector<16x512xf32>
    %170 = arith.mulf %169, %168 : vector<16x512xf32>
    %cst_49 = arith.constant 4.471500e-02 : f32
    %171 = vector.broadcast %cst_49 : f32 to vector<16x512xf32>
    %172 = arith.mulf %171, %168 : vector<16x512xf32>
    %173 = arith.mulf %172, %168 : vector<16x512xf32>
    %174 = arith.mulf %173, %168 : vector<16x512xf32>
    %175 = arith.addf %168, %174 : vector<16x512xf32>
    %cst_50 = arith.constant 0.797884583 : f32
    %176 = vector.broadcast %cst_50 : f32 to vector<16x512xf32>
    %177 = arith.mulf %176, %175 : vector<16x512xf32>
    %178 = math.tanh %177 : vector<16x512xf32>
    %cst_51 = arith.constant 1.000000e+00 : f32
    %179 = vector.broadcast %cst_51 : f32 to vector<16x512xf32>
    %180 = arith.addf %179, %178 : vector<16x512xf32>
    %181 = arith.mulf %170, %180 : vector<16x512xf32>
    %182 = arith.truncf %181 : vector<16x512xf32> to vector<16x512xbf16>
    %c0_52 = arith.constant 0 : index
    %c0_53 = arith.constant 0 : index
    %c0_54 = arith.constant 0 : index
    %183 = vector.load %arg9[%c0_52, %c0_53, %c0_54] : memref<1x512x128xbf16, #tpu.memory_space<vmem>>, vector<1x512x128xbf16>
    %184 = vector.shape_cast %183 : vector<1x512x128xbf16> to vector<512x128xbf16>
    %cst_55 = arith.constant dense<0.000000e+00> : vector<16x128xf32>
    %185 = tpu.matmul %182, %184, %cst_55 {dimension_numbers = #tpu.dot_dimension_numbers<[1], [0], [0], [1], [0, 0, 1, 1], [], []>} : vector<16x512xbf16>, vector<512x128xbf16>, vector<16x128xf32> -> vector<16x128xf32>
    %186 = arith.addf %140, %185 : vector<16x128xf32>
    %187 = vector.broadcast %10 : vector<1x128xf32> to vector<16x128xf32>
    %188 = arith.addf %186, %187 : vector<16x128xf32>
    %c0_56 = arith.constant 0 : index
    %c0_57 = arith.constant 0 : index
    %189 = vector.load %arg13[%c0_56, %c0_57] : memref<16x128xf32, #tpu.memory_space<vmem>>, vector<16x128xf32>
    tpu.vector_store %arg13[%c0_56, %c0_57], %188 {strides = array<i32>} : memref<16x128xf32, #tpu.memory_space<vmem>>, vector<16x128xf32>,
    %c1_i32 = arith.constant 1 : i32
    %190 = arith.cmpi eq, %arg1, %c1_i32 : i32
    %191 = arith.extui %190 : i1 to i32
    %c0_i32_58 = arith.constant 0 : i32
    %192 = arith.cmpi ne, %191, %c0_i32_58 : i32
    scf.if %192 {
      %c0_59 = arith.constant 0 : index
      %c0_60 = arith.constant 0 : index
      %193 = vector.load %arg11[%c0_59, %c0_60] : memref<2x128xf32, #tpu.memory_space<vmem>>, vector<1x128xf32>
      %c1 = arith.constant 1 : index
      %c0_61 = arith.constant 0 : index
      %194 = vector.load %arg11[%c1, %c0_61] : memref<2x128xf32, #tpu.memory_space<vmem>>, vector<1x128xf32>
      %cst_62 = arith.constant dense<0.000000e+00> : vector<16xf32>
      %195 = vector.multi_reduction <add>, %188, %cst_62 [1] : vector<16x128xf32> to vector<16xf32>
      %196 = vector.shape_cast %195 : vector<16xf32> to vector<16x1xf32>
      %cst_63 = arith.constant 1.280000e+02 : f32
      %197 = vector.broadcast %cst_63 : f32 to vector<16x1xf32>
      %198 = arith.divf %196, %197 : vector<16x1xf32>
      %199 = vector.broadcast %198 : vector<16x1xf32> to vector<16x128xf32>
      %200 = arith.subf %188, %199 : vector<16x128xf32>
      %201 = arith.mulf %200, %200 : vector<16x128xf32>
      %cst_64 = arith.constant dense<0.000000e+00> : vector<16xf32>
      %202 = vector.multi_reduction <add>, %201, %cst_64 [1] : vector<16x128xf32> to vector<16xf32>
      %203 = vector.shape_cast %202 : vector<16xf32> to vector<16x1xf32>
      %cst_65 = arith.constant 1.280000e+02 : f32
      %204 = vector.broadcast %cst_65 : f32 to vector<16x1xf32>
      %205 = arith.divf %203, %204 : vector<16x1xf32>
      %206 = vector.broadcast %198 : vector<16x1xf32> to vector<16x128xf32>
      %207 = arith.subf %188, %206 : vector<16x128xf32>
      %cst_66 = arith.constant 9.99999974E-6 : f32
      %208 = vector.broadcast %cst_66 : f32 to vector<16x1xf32>
      %209 = arith.addf %205, %208 : vector<16x1xf32>
      %210 = math.rsqrt %209 : vector<16x1xf32>
      %211 = vector.broadcast %210 : vector<16x1xf32> to vector<16x128xf32>
      %212 = arith.mulf %207, %211 : vector<16x128xf32>
      %213 = vector.broadcast %193 : vector<1x128xf32> to vector<16x128xf32>
      %214 = arith.mulf %212, %213 : vector<16x128xf32>
      %215 = vector.broadcast %194 : vector<1x128xf32> to vector<16x128xf32>
      %216 = arith.addf %214, %215 : vector<16x128xf32>
      %c0_67 = arith.constant 0 : index
      %c0_68 = arith.constant 0 : index
      %217 = vector.load %arg12[%c0_67, %c0_68] : memref<16x128xf32, #tpu.memory_space<vmem>>, vector<16x128xf32>
      tpu.vector_store %arg12[%c0_67, %c0_68], %216 {strides = array<i32>} : memref<16x128xf32, #tpu.memory_space<vmem>>, vector<16x128xf32>,
    } else {
    }
    return
  }
  func.func @transform_0(%arg0: i32, %arg1: i32) -> (i32, i32) {
    %c0_i32 = arith.constant 0 : i32
    %c0_i32_0 = arith.constant 0 : i32
    return %arg0, %c0_i32 : i32, i32
  }
  func.func @transform_1(%arg0: i32, %arg1: i32) -> (i32, i32) {
    %c0_i32 = arith.constant 0 : i32
    %c0_i32_0 = arith.constant 0 : i32
    %c0_i32_1 = arith.constant 0 : i32
    return %c0_i32, %c0_i32_0 : i32, i32
  }
  func.func @transform_2(%arg0: i32, %arg1: i32) -> (i32, i32) {
    %c0_i32 = arith.constant 0 : i32
    %c0_i32_0 = arith.constant 0 : i32
    %c0_i32_1 = arith.constant 0 : i32
    return %c0_i32, %c0_i32_0 : i32, i32
  }
  func.func @transform_3(%arg0: i32, %arg1: i32) -> (i32, i32) {
    %c0_i32 = arith.constant 0 : i32
    %c0_i32_0 = arith.constant 0 : i32
    %c0_i32_1 = arith.constant 0 : i32
    return %c0_i32, %c0_i32_0 : i32, i32
  }
  func.func @transform_4(%arg0: i32, %arg1: i32) -> (i32, i32, i32) {
    %c0_i32 = arith.constant 0 : i32
    %c0_i32_0 = arith.constant 0 : i32
    %c0_i32_1 = arith.constant 0 : i32
    return %arg1, %c0_i32, %c0_i32_0 : i32, i32, i32
  }
  func.func @transform_5(%arg0: i32, %arg1: i32) -> (i32, i32, i32) {
    %c0_i32 = arith.constant 0 : i32
    %c0_i32_0 = arith.constant 0 : i32
    %c0_i32_1 = arith.constant 0 : i32
    return %arg1, %c0_i32, %c0_i32_0 : i32, i32, i32
  }
  func.func @transform_6(%arg0: i32, %arg1: i32) -> (i32, i32, i32) {
    %c0_i32 = arith.constant 0 : i32
    %c0_i32_0 = arith.constant 0 : i32
    %c0_i32_1 = arith.constant 0 : i32
    return %arg1, %c0_i32, %c0_i32_0 : i32, i32, i32
  }
  func.func @transform_7(%arg0: i32, %arg1: i32) -> (i32, i32, i32) {
    %c0_i32 = arith.constant 0 : i32
    %c0_i32_0 = arith.constant 0 : i32
    %c0_i32_1 = arith.constant 0 : i32
    return %arg1, %c0_i32, %c0_i32_0 : i32, i32, i32
  }
  func.func @transform_8(%arg0: i32, %arg1: i32) -> (i32, i32, i32) {
    %c0_i32 = arith.constant 0 : i32
    %c0_i32_0 = arith.constant 0 : i32
    %c0_i32_1 = arith.constant 0 : i32
    return %arg1, %c0_i32, %c0_i32_0 : i32, i32, i32
  }
  func.func @transform_9(%arg0: i32, %arg1: i32) -> (i32, i32) {
    %c0_i32 = arith.constant 0 : i32
    %c0_i32_0 = arith.constant 0 : i32
    %c0_i32_1 = arith.constant 0 : i32
    return %c0_i32, %c0_i32_0 : i32, i32
  }
  func.func @transform_10(%arg0: i32, %arg1: i32) -> (i32, i32) {
    %c0_i32 = arith.constant 0 : i32
    %c0_i32_0 = arith.constant 0 : i32
    return %arg0, %c0_i32 : i32, i32
  }
}

</mosaic_0001>

<llo_original>
// kernel: tpu_custom_call.1
$region0: #{tpu_custom_call.1}
  #allocation0 [shape = 'u32[]', space=smem, size = 0x4, offset = 0x4, fixed_abs, tag = 'smem constant byte address 0x4 - core index']
  #allocation1 [shape = 'u32[144,128]{1,0:T(1,128)}', space=vmem, size = 0x12000, scoped, tag = 'internal scratch']
  #allocation2 [shape = 'f32[16,128]{1,0:T(8,128)}', space=vmem, size = 0x2000, scoped, tag = 'scratch operand']
  %s0 = inlined_call_operand.vmem [shape: f32[32,4], index: 0, kind: input, shape index: {}]
  %s1 = inlined_call_operand.vmem [shape: bf16[4,128], index: 1, kind: input, shape index: {}]
  %s2 = inlined_call_operand.hbm [shape: f32[16,128], index: 2, kind: input, shape index: {}]
  %s3 = inlined_call_operand.hbm [shape: f32[16,16], index: 3, kind: input, shape index: {}]
  %s4 = inlined_call_operand.hbm [shape: bf16[2,128,384], index: 4, kind: input, shape index: {}]
  %s5 = inlined_call_operand.hbm [shape: bf16[2,128,128], index: 5, kind: input, shape index: {}]
  %s6 = inlined_call_operand.hbm [shape: bf16[2,128,512], index: 6, kind: input, shape index: {}]
  %s7 = inlined_call_operand.hbm [shape: bf16[2,512,128], index: 7, kind: input, shape index: {}]
  %s8 = inlined_call_operand.vmem [shape: f32[2,8,512], index: 8, kind: input, shape index: {}]
  %s9 = inlined_call_operand.vmem [shape: f32[2,128], index: 9, kind: input, shape index: {}]
  %s10 = inlined_call_operand.hbm [shape: f32[32,128], index: 10, kind: output, shape index: {}]
  %s11 = sld [smem:[#allocation0]]
  $region105: #{tpu_custom_call.1} parent=0
    _
  %s13 = ssub.s32 1, %s11
  %s14 = scalar_select 0, %s13, %s11
  $region1: #{tpu_custom_call.1} parent=0
    #allocation3 [shape = 'u8[8192]{0}', space=vmem, size = 0x2000, scoped, tag = 'input window, operand 2, single buffered']
    #allocation4 [shape = 's32[2]{0}', space=sflag, size = 0x8, scoped, tag = 'scoped memory for tpu_custom_call.1']
    #allocation5 [shape = 's32[2]{0}', space=sflag, size = 0x8, scoped, tag = 'scoped memory for tpu_custom_call.1']
    #allocation6 [shape = 'u8[8192]{0}', space=vmem, size = 0x2000, scoped, tag = 'input window, operand 3, single buffered']
    #allocation7 [shape = 's32[1]{0}', space=sflag, size = 0x4, scoped, tag = 'scoped memory for tpu_custom_call.1']
    #allocation8 [shape = 'u8[196608]{0}', space=vmem, size = 0x30000, scoped, tag = 'input window, operand 4']
    #allocation9 [shape = 'u8[65536]{0}', space=vmem, size = 0x10000, scoped, tag = 'input window, operand 5']
    #allocation10 [shape = 'u8[262144]{0}', space=vmem, size = 0x40000, scoped, tag = 'input window, operand 6']
    #allocation11 [shape = 'u8[262144]{0}', space=vmem, size = 0x40000, scoped, tag = 'input window, operand 7']
    #allocation12 [shape = 'u8[16384]{0}', space=vmem, size = 0x4000, scoped, tag = 'output window, operand 0']
    %15 = vsyncpa [#allocation4], 0
    %16 = vsyncpa [#allocation7], 0
    %17 = vsyncpa [#allocation5], 0
    %s18 = scalar_lea.sflag [#allocation5], 1
    %19 = vsyncpa %s18, 0
    loop: start=0, step=1, limit=6
    $region2: #{tpu_custom_call.1} parent=1 // loop_pre_header
      _
    $region3: #{tpu_custom_call.1} parent=1 // loop_header
      %s21 = sphi 0, %s25
      %p22 = scmp.ge.s32.totalorder %s21, 6
      %s28 = sphi 0, %s40
      %s29 = sphi 0, %s36
      %s30 = sphi 0, %s28
      %s31 = sphi 0, %s29
      %s32 = sphi 0, %s30
      %s33 = sphi 0, %s31
      %s43 = sphi 0, %s45
      %s46 = sphi 0, %s43
      %s47 = sphi 0, %s46
      %s63 = sphi 0, %s47
      %s67 = sphi 0, %s67
      %s69 = sphi 0, %s67
      %s70 = sphi 0, %s69
      %s84 = sphi 0, %s70
      %s88 = sphi 0, %s88
      %s90 = sphi 0, %s88
      %s91 = sphi 0, %s90
      %s105 = sphi 0, %s91
      %s109 = sphi 0, %s109
      %s111 = sphi 0, %s109
      %s112 = sphi 0, %s111
      %s126 = sphi 0, %s112
      %s132 = sphi 0, %s134
      %s135 = sphi 0, %s132
      %s136 = sphi 0, %s135
      %s152 = sphi 0, %s136
      %s158 = sphi 0, %s160
      %s161 = sphi 0, %s158
      %s162 = sphi 0, %s161
      %s178 = sphi 0, %s162
      %s184 = sphi 0, %s186
      %s187 = sphi 0, %s184
      %s188 = sphi 0, %s187
      %s204 = sphi 0, %s188
      %s210 = sphi 0, %s212
      %s213 = sphi 0, %s210
      %s214 = sphi 0, %s213
      %s230 = sphi 0, %s214
      %s236 = sphi 0, %s238
      %s239 = sphi 0, %s236
      %s240 = sphi 0, %s239
      %s256 = sphi 0, %s240
      %s260 = sphi 0, %s260
      %s262 = sphi 0, %s260
      %s263 = sphi 0, %s262
      %s277 = sphi 0, %s263
      %s283 = sphi 0, %s285
      %s286 = sphi 0, %s283
      %s287 = sphi 0, %s286
      %s303 = sphi 0, %s287
    $region4: #{tpu_custom_call.1} parent=1 // loop_header_branch
      %24 = sbr.rel (%p22) target = $region8
    $region5: #{tpu_custom_call.1} parent=1 // loop_body
      %s26 = ssub.s32 %s21, 1
      %s27 = ssub.s32 %s21, 2
      %s34 = sadd.s32 1, %s29
      %p35 = scmp.ge.s32.totalorder %s34, 2
      %s36 = scalar_select %p35, 0, %s34
      %s37 = sadd.s32 1, %s28
      %s38 = scalar_select %p35, %s37, %s28
      %p39 = scmp.ge.s32.totalorder %s38, 2
      %s40 = scalar_select %p39, 0, %s38
      %s41 = ssub.s32 %s28, %s40
      %p42 = scmp.eq.s32.totalorder %s41, 0
      %s44 = sadd.s32 %s43, 1
      %s45 = scalar_select %p42, %s43, %s44
      %p48 = pneg %p42
      %p49 = scmp.eq.s32.totalorder %s21, 3
      %p50 = por %p48, %p49
      %p51 = scmp.ne.s32.totalorder %s43, %s46
      %p52 = scmp.eq.s32.totalorder %s21, 0
      %p53 = por %p51, %p52
      %p54 = scmp.ne.s32.totalorder %s43, %s46
      %p55 = scmp.eq.s32.totalorder %s26, 3
      %p56 = por %p54, %p55
      %p57 = scmp.ne.s32.totalorder %s46, %s47
      %p58 = scmp.eq.s32.totalorder %s26, 0
      %p59 = por %p57, %p58
      %p60 = scmp.ne.s32.totalorder %s46, %s47
      %p61 = scmp.eq.s32.totalorder %s27, 3
      %p62 = por %p60, %p61
      %p64 = scmp.ne.s32.totalorder %s47, %s63
      %p65 = scmp.eq.s32.totalorder %s27, 0
      %p66 = por %p64, %p65
      %s68 = sadd.s32 %s67, 1
      %p71 = scmp.eq.s32.totalorder %s21, 3
      %p72 = scmp.ne.s32.totalorder %s67, %s69
      %p73 = scmp.eq.s32.totalorder %s21, 0
      %p74 = por %p72, %p73
      %p75 = scmp.ne.s32.totalorder %s67, %s69
      %p76 = scmp.eq.s32.totalorder %s26, 3
      %p77 = por %p75, %p76
      %p78 = scmp.ne.s32.totalorder %s69, %s70
      %p79 = scmp.eq.s32.totalorder %s26, 0
      %p80 = por %p78, %p79
      %p81 = scmp.ne.s32.totalorder %s69, %s70
      %p82 = scmp.eq.s32.totalorder %s27, 3
      %p83 = por %p81, %p82
      %p85 = scmp.ne.s32.totalorder %s70, %s84
      %p86 = scmp.eq.s32.totalorder %s27, 0
      %p87 = por %p85, %p86
      %s89 = sadd.s32 %s88, 1
      %p92 = scmp.eq.s32.totalorder %s21, 3
      %p93 = scmp.ne.s32.totalorder %s88, %s90
      %p94 = scmp.eq.s32.totalorder %s21, 0
      %p95 = por %p93, %p94
      %p96 = scmp.ne.s32.totalorder %s88, %s90
      %p97 = scmp.eq.s32.totalorder %s26, 3
      %p98 = por %p96, %p97
      %p99 = scmp.ne.s32.totalorder %s90, %s91
      %p100 = scmp.eq.s32.totalorder %s26, 0
      %p101 = por %p99, %p100
      %p102 = scmp.ne.s32.totalorder %s90, %s91
      %p103 = scmp.eq.s32.totalorder %s27, 3
      %p104 = por %p102, %p103
      %p106 = scmp.ne.s32.totalorder %s91, %s105
      %p107 = scmp.eq.s32.totalorder %s27, 0
      %p108 = por %p106, %p107
      %s110 = sadd.s32 %s109, 1
      %p113 = scmp.eq.s32.totalorder %s21, 3
      %p114 = scmp.ne.s32.totalorder %s109, %s111
      %p115 = scmp.eq.s32.totalorder %s21, 0
      %p116 = por %p114, %p115
      %p117 = scmp.ne.s32.totalorder %s109, %s111
      %p118 = scmp.eq.s32.totalorder %s26, 3
      %p119 = por %p117, %p118
      %p120 = scmp.ne.s32.totalorder %s111, %s112
      %p121 = scmp.eq.s32.totalorder %s26, 0
      %p122 = por %p120, %p121
      %p123 = scmp.ne.s32.totalorder %s111, %s112
      %p124 = scmp.eq.s32.totalorder %s27, 3
      %p125 = por %p123, %p124
      %p127 = scmp.ne.s32.totalorder %s112, %s126
      %p128 = scmp.eq.s32.totalorder %s27, 0
      %p129 = por %p127, %p128
      %s130 = ssub.s32 %s29, %s36
      %p131 = scmp.eq.s32.totalorder %s130, 0
      %s133 = sadd.s32 %s132, 1
      %s134 = scalar_select %p131, %s132, %s133
      %p137 = pneg %p131
      %p138 = scmp.eq.s32.totalorder %s21, 3
      %p139 = por %p137, %p138
      %p140 = scmp.ne.s32.totalorder %s132, %s135
      %p141 = scmp.eq.s32.totalorder %s21, 0
      %p142 = por %p140, %p141
      %p143 = scmp.ne.s32.totalorder %s132, %s135
      %p144 = scmp.eq.s32.totalorder %s26, 3
      %p145 = por %p143, %p144
      %p146 = scmp.ne.s32.totalorder %s135, %s136
      %p147 = scmp.eq.s32.totalorder %s26, 0
      %p148 = por %p146, %p147
      %p149 = scmp.ne.s32.totalorder %s135, %s136
      %p150 = scmp.eq.s32.totalorder %s27, 3
      %p151 = por %p149, %p150
      %p153 = scmp.ne.s32.totalorder %s136, %s152
      %p154 = scmp.eq.s32.totalorder %s27, 0
      %p155 = por %p153, %p154
      %s156 = ssub.s32 %s29, %s36
      %p157 = scmp.eq.s32.totalorder %s156, 0
      %s159 = sadd.s32 %s158, 1
      %s160 = scalar_select %p157, %s158, %s159
      %p163 = pneg %p157
      %p164 = scmp.eq.s32.totalorder %s21, 3
      %p165 = por %p163, %p164
      %p166 = scmp.ne.s32.totalorder %s158, %s161
      %p167 = scmp.eq.s32.totalorder %s21, 0
      %p168 = por %p166, %p167
      %p169 = scmp.ne.s32.totalorder %s158, %s161
      %p170 = scmp.eq.s32.totalorder %s26, 3
      %p171 = por %p169, %p170
      %p172 = scmp.ne.s32.totalorder %s161, %s162
      %p173 = scmp.eq.s32.totalorder %s26, 0
      %p174 = por %p172, %p173
      %p175 = scmp.ne.s32.totalorder %s161, %s162
      %p176 = scmp.eq.s32.totalorder %s27, 3
      %p177 = por %p175, %p176
      %p179 = scmp.ne.s32.totalorder %s162, %s178
      %p180 = scmp.eq.s32.totalorder %s27, 0
      %p181 = por %p179, %p180
      %s182 = ssub.s32 %s29, %s36
      %p183 = scmp.eq.s32.totalorder %s182, 0
      %s185 = sadd.s32 %s184, 1
      %s186 = scalar_select %p183, %s184, %s185
      %p189 = pneg %p183
      %p190 = scmp.eq.s32.totalorder %s21, 3
      %p191 = por %p189, %p190
      %p192 = scmp.ne.s32.totalorder %s184, %s187
      %p193 = scmp.eq.s32.totalorder %s21, 0
      %p194 = por %p192, %p193
      %p195 = scmp.ne.s32.totalorder %s184, %s187
      %p196 = scmp.eq.s32.totalorder %s26, 3
      %p197 = por %p195, %p196
      %p198 = scmp.ne.s32.totalorder %s187, %s188
      %p199 = scmp.eq.s32.totalorder %s26, 0
      %p200 = por %p198, %p199
      %p201 = scmp.ne.s32.totalorder %s187, %s188
      %p202 = scmp.eq.s32.totalorder %s27, 3
      %p203 = por %p201, %p202
      %p205 = scmp.ne.s32.totalorder %s188, %s204
      %p206 = scmp.eq.s32.totalorder %s27, 0
      %p207 = por %p205, %p206
      %s208 = ssub.s32 %s29, %s36
      %p209 = scmp.eq.s32.totalorder %s208, 0
      %s211 = sadd.s32 %s210, 1
      %s212 = scalar_select %p209, %s210, %s211
      %p215 = pneg %p209
      %p216 = scmp.eq.s32.totalorder %s21, 3
      %p217 = por %p215, %p216
      %p218 = scmp.ne.s32.totalorder %s210, %s213
      %p219 = scmp.eq.s32.totalorder %s21, 0
      %p220 = por %p218, %p219
      %p221 = scmp.ne.s32.totalorder %s210, %s213
      %p222 = scmp.eq.s32.totalorder %s26, 3
      %p223 = por %p221, %p222
      %p224 = scmp.ne.s32.totalorder %s213, %s214
      %p225 = scmp.eq.s32.totalorder %s26, 0
      %p226 = por %p224, %p225
      %p227 = scmp.ne.s32.totalorder %s213, %s214
      %p228 = scmp.eq.s32.totalorder %s27, 3
      %p229 = por %p227, %p228
      %p231 = scmp.ne.s32.totalorder %s214, %s230
      %p232 = scmp.eq.s32.totalorder %s27, 0
      %p233 = por %p231, %p232
      %s234 = ssub.s32 %s29, %s36
      %p235 = scmp.eq.s32.totalorder %s234, 0
      %s237 = sadd.s32 %s236, 1
      %s238 = scalar_select %p235, %s236, %s237
      %p241 = pneg %p235
      %p242 = scmp.eq.s32.totalorder %s21, 3
      %p243 = por %p241, %p242
      %p244 = scmp.ne.s32.totalorder %s236, %s239
      %p245 = scmp.eq.s32.totalorder %s21, 0
      %p246 = por %p244, %p245
      %p247 = scmp.ne.s32.totalorder %s236, %s239
      %p248 = scmp.eq.s32.totalorder %s26, 3
      %p249 = por %p247, %p248
      %p250 = scmp.ne.s32.totalorder %s239, %s240
      %p251 = scmp.eq.s32.totalorder %s26, 0
      %p252 = por %p250, %p251
      %p253 = scmp.ne.s32.totalorder %s239, %s240
      %p254 = scmp.eq.s32.totalorder %s27, 3
      %p255 = por %p253, %p254
      %p257 = scmp.ne.s32.totalorder %s240, %s256
      %p258 = scmp.eq.s32.totalorder %s27, 0
      %p259 = por %p257, %p258
      %s261 = sadd.s32 %s260, 1
      %p264 = scmp.eq.s32.totalorder %s21, 3
      %p265 = scmp.ne.s32.totalorder %s260, %s262
      %p266 = scmp.eq.s32.totalorder %s21, 0
      %p267 = por %p265, %p266
      %p268 = scmp.ne.s32.totalorder %s260, %s262
      %p269 = scmp.eq.s32.totalorder %s26, 3
      %p270 = por %p268, %p269
      %p271 = scmp.ne.s32.totalorder %s262, %s263
      %p272 = scmp.eq.s32.totalorder %s26, 0
      %p273 = por %p271, %p272
      %p274 = scmp.ne.s32.totalorder %s262, %s263
      %p275 = scmp.eq.s32.totalorder %s27, 3
      %p276 = por %p274, %p275
      %p278 = scmp.ne.s32.totalorder %s263, %s277
      %p279 = scmp.eq.s32.totalorder %s27, 0
      %p280 = por %p278, %p279
      %s281 = ssub.s32 %s28, %s40
      %p282 = scmp.eq.s32.totalorder %s281, 0
      %s284 = sadd.s32 %s283, 1
      %s285 = scalar_select %p282, %s283, %s284
      %p288 = pneg %p282
      %p289 = scmp.eq.s32.totalorder %s21, 3
      %p290 = por %p288, %p289
      %p291 = scmp.ne.s32.totalorder %s283, %s286
      %p292 = scmp.eq.s32.totalorder %s21, 0
      %p293 = por %p291, %p292
      %p294 = scmp.ne.s32.totalorder %s283, %s286
      %p295 = scmp.eq.s32.totalorder %s26, 3
      %p296 = por %p294, %p295
      %p297 = scmp.ne.s32.totalorder %s286, %s287
      %p298 = scmp.eq.s32.totalorder %s26, 0
      %p299 = por %p297, %p298
      %p300 = scmp.ne.s32.totalorder %s286, %s287
      %p301 = scmp.eq.s32.totalorder %s27, 3
      %p302 = por %p300, %p301
      %p304 = scmp.ne.s32.totalorder %s287, %s303
      %p305 = scmp.eq.s32.totalorder %s27, 0
      %p306 = por %p304, %p305
      %p307 = scmp.le.s32.totalorder 1, %s21
      %p308 = scmp.lt.s32.totalorder %s21, 5
      %p309 = pnand %p307, %p308
      %p310 = pneg %p309
      // Predicated region
      $region9: #{tpu_custom_call.1} parent=5 // pred_check
        _
      $region10: #{tpu_custom_call.1} parent=5 // pred_check_branch
        %312 = sbr.rel (%p309) target = $region12
      $region11: #{tpu_custom_call.1} parent=5 // pred_region
        %s313 = ssub.s32 %s21, 1
        // Predicated region
        $region13: #{tpu_custom_call.1} parent=11 // pred_check
          %p314 = pneg %p80
        $region14: #{tpu_custom_call.1} parent=11 // pred_check_branch
          %316 = sbr.rel (%p314) target = $region16
        $region15: #{tpu_custom_call.1} parent=11 // pred_region
          _
        $region16: #{tpu_custom_call.1} parent=11 // pred_fallthru
          _
        // Predicated region
        $region17: #{tpu_custom_call.1} parent=11 // pred_check
          %p317 = pneg %p101
        $region18: #{tpu_custom_call.1} parent=11 // pred_check_branch
          %319 = sbr.rel (%p317) target = $region20
        $region19: #{tpu_custom_call.1} parent=11 // pred_region
          %s321 = ssub.s32 256, 256
          %322 = vsyncadd [#allocation4], %s321
          %s323 = sshll.u32 [#allocation3], 4
          %s324 = int_to_ptr.vmem [resolvable:$true] %s323
          %329 = dma.hbm_to_vmem [thread:$0]  %s2, 256, %s324, [#allocation4], 128, 128, 8
        $region20: #{tpu_custom_call.1} parent=11 // pred_fallthru
          _
        // Predicated region
        $region21: #{tpu_custom_call.1} parent=11 // pred_check
          %p330 = pneg %p122
        $region22: #{tpu_custom_call.1} parent=11 // pred_check_branch
          %332 = sbr.rel (%p330) target = $region24
        $region23: #{tpu_custom_call.1} parent=11 // pred_region
          %s334 = ssub.s32 256, 256
          %335 = vsyncadd [#allocation7], %s334
          %s336 = sshll.u32 [#allocation6], 4
          %s337 = int_to_ptr.vmem [resolvable:$true] %s336
          %342 = dma.hbm_to_vmem [thread:$0]  %s3, 256, %s337, [#allocation7], 128, 128, 8
        $region24: #{tpu_custom_call.1} parent=11 // pred_fallthru
          _
        // Predicated region
        $region25: #{tpu_custom_call.1} parent=11 // pred_check
          %p343 = pneg %p273
        $region26: #{tpu_custom_call.1} parent=11 // pred_check_branch
          %345 = sbr.rel (%p343) target = $region28
        $region27: #{tpu_custom_call.1} parent=11 // pred_region
          _
        $region28: #{tpu_custom_call.1} parent=11 // pred_fallthru
          _
      $region12: #{tpu_custom_call.1} parent=5 // pred_fallthru
        _
      %p346 = scmp.lt.s32.totalorder %s21, 4
      // Predicated region
      $region29: #{tpu_custom_call.1} parent=5 // pred_check
        %p347 = pneg %p346
      $region30: #{tpu_custom_call.1} parent=5 // pred_check_branch
        %349 = sbr.rel (%p347) target = $region32
      $region31: #{tpu_custom_call.1} parent=5 // pred_region
        // Predicated region
        $region33: #{tpu_custom_call.1} parent=31 // pred_check
          %p350 = pneg %p53
        $region34: #{tpu_custom_call.1} parent=31 // pred_check_branch
          %352 = sbr.rel (%p350) target = $region36
        $region35: #{tpu_custom_call.1} parent=31 // pred_region
          %s353 = smul.u32 2, %s28
          %p354 = scmp.lt.s32.totalorder %s353, 3
          %s355 = scalar_select %p354, %s353, 3
          %s356 = smul.addr %s355, 8
          %s357 = scalar_lea.vmem %s0, %s356
          %s358 = smul.u32 2, %s28
        $region36: #{tpu_custom_call.1} parent=31 // pred_fallthru
          _
        // Predicated region
        $region37: #{tpu_custom_call.1} parent=31 // pred_check
          %p359 = pneg %p142
        $region38: #{tpu_custom_call.1} parent=31 // pred_check_branch
          %361 = sbr.rel (%p359) target = $region40
        $region39: #{tpu_custom_call.1} parent=31 // pred_region
          %s362 = sand.u32 %s21, 1
          %s363 = scalar_lea.sflag [#allocation4], %s362
          %s364 = sand.u32 %s132, 1
          %s365 = smul.addr %s364, 192
          %s366 = scalar_lea.vmem [#allocation8], %s365
          %s368 = ssub.s32 3072, 3072
          %369 = vsyncadd %s363, %s368
          %s370 = smul.addr %s29, 48
          %s371 = smul.addr %s370, 64
          %s372 = scalar_lea.hbm %s4, %s371
          %s373 = sshll.u32 %s366, 4
          %s374 = int_to_ptr.vmem [resolvable:$true] %s373
          %379 = dma.hbm_to_vmem [thread:$0]  %s372, 3072, %s374, %s363, 192, 192, 12
        $region40: #{tpu_custom_call.1} parent=31 // pred_fallthru
          _
        // Predicated region
        $region41: #{tpu_custom_call.1} parent=31 // pred_check
          %p380 = pneg %p168
        $region42: #{tpu_custom_call.1} parent=31 // pred_check_branch
          %382 = sbr.rel (%p380) target = $region44
        $region43: #{tpu_custom_call.1} parent=31 // pred_region
          %s383 = sand.u32 %s21, 1
          %s384 = scalar_lea.sflag [#allocation4], %s383
          %s385 = sand.u32 %s158, 1
          %s386 = smul.addr %s385, 64
          %s387 = scalar_lea.vmem [#allocation9], %s386
          %s389 = ssub.s32 1024, 1024
          %390 = vsyncadd %s384, %s389
          %s391 = smul.addr %s29, 16
          %s392 = smul.addr %s391, 64
          %s393 = scalar_lea.hbm %s5, %s392
          %s394 = sshll.u32 %s387, 4
          %s395 = int_to_ptr.vmem [resolvable:$true] %s394
          %400 = dma.hbm_to_vmem [thread:$0]  %s393, 1024, %s395, %s384, 64, 64, 4
        $region44: #{tpu_custom_call.1} parent=31 // pred_fallthru
          _
        // Predicated region
        $region45: #{tpu_custom_call.1} parent=31 // pred_check
          %p401 = pneg %p194
        $region46: #{tpu_custom_call.1} parent=31 // pred_check_branch
          %403 = sbr.rel (%p401) target = $region48
        $region47: #{tpu_custom_call.1} parent=31 // pred_region
          %s404 = sand.u32 %s21, 1
          %s405 = scalar_lea.sflag [#allocation4], %s404
          %s406 = sand.u32 %s184, 1
          %s407 = smul.addr %s406, 256
          %s408 = scalar_lea.vmem [#allocation10], %s407
          %s410 = ssub.s32 4096, 4096
          %411 = vsyncadd %s405, %s410
          %s412 = smul.addr %s29, 64
          %s413 = smul.addr %s412, 64
          %s414 = scalar_lea.hbm %s6, %s413
          %s415 = sshll.u32 %s408, 4
          %s416 = int_to_ptr.vmem [resolvable:$true] %s415
          %421 = dma.hbm_to_vmem [thread:$0]  %s414, 4096, %s416, %s405, 256, 256, 16
        $region48: #{tpu_custom_call.1} parent=31 // pred_fallthru
          _
        // Predicated region
        $region49: #{tpu_custom_call.1} parent=31 // pred_check
          %p422 = pneg %p220
        $region50: #{tpu_custom_call.1} parent=31 // pred_check_branch
          %424 = sbr.rel (%p422) target = $region52
        $region51: #{tpu_custom_call.1} parent=31 // pred_region
          %s425 = sand.u32 %s21, 1
          %s426 = scalar_lea.sflag [#allocation4], %s425
          %s427 = sand.u32 %s210, 1
          %s428 = smul.addr %s427, 256
          %s429 = scalar_lea.vmem [#allocation11], %s428
          %s431 = ssub.s32 4096, 4096
          %432 = vsyncadd %s426, %s431
          %s433 = smul.addr %s29, 64
          %s434 = smul.addr %s433, 64
          %s435 = scalar_lea.hbm %s7, %s434
          %s436 = sshll.u32 %s429, 4
          %s437 = int_to_ptr.vmem [resolvable:$true] %s436
          %442 = dma.hbm_to_vmem [thread:$0]  %s435, 4096, %s437, %s426, 64, 64, 4
        $region52: #{tpu_custom_call.1} parent=31 // pred_fallthru
          _
        // Predicated region
        $region53: #{tpu_custom_call.1} parent=31 // pred_check
          %p443 = pneg %p246
        $region54: #{tpu_custom_call.1} parent=31 // pred_check_branch
          %445 = sbr.rel (%p443) target = $region56
        $region55: #{tpu_custom_call.1} parent=31 // pred_region
          %p446 = scmp.lt.s32.totalorder %s29, 1
          %s447 = scalar_select %p446, %s29, 1
          %s448 = smul.addr %s447, 4
          %s449 = smul.addr %s448, 8
          %s450 = scalar_lea.vmem %s8, %s449
        $region56: #{tpu_custom_call.1} parent=31 // pred_fallthru
          _
      $region32: #{tpu_custom_call.1} parent=5 // pred_fallthru
        _
      %p451 = scmp.le.s32.totalorder 1, %s21
      %p452 = scmp.lt.s32.totalorder %s21, 5
      %p453 = pnand %p451, %p452
      %p454 = pneg %p453
      // Predicated region
      $region57: #{tpu_custom_call.1} parent=5 // pred_check
        _
      $region58: #{tpu_custom_call.1} parent=5 // pred_check_branch
        %456 = sbr.rel (%p453) target = $region60
      $region59: #{tpu_custom_call.1} parent=5 // pred_region
        %s457 = ssub.s32 %s21, 1
        // Predicated region
        $region61: #{tpu_custom_call.1} parent=59 // pred_check
          %p458 = pneg %p101
        $region62: #{tpu_custom_call.1} parent=59 // pred_check_branch
          %460 = sbr.rel (%p458) target = $region64
        $region63: #{tpu_custom_call.1} parent=59 // pred_region
          %461 = dma.done [#allocation4], 256
        $region64: #{tpu_custom_call.1} parent=59 // pred_fallthru
          _
        // Predicated region
        $region65: #{tpu_custom_call.1} parent=59 // pred_check
          %p462 = pneg %p122
        $region66: #{tpu_custom_call.1} parent=59 // pred_check_branch
          %464 = sbr.rel (%p462) target = $region68
        $region67: #{tpu_custom_call.1} parent=59 // pred_region
          %465 = dma.done [#allocation7], 256
        $region68: #{tpu_custom_call.1} parent=59 // pred_fallthru
          _
        %s466 = sand.u32 %s26, 1
        %s467 = scalar_lea.sflag [#allocation4], %s466
        %s468 = sand.u32 %s135, 1
        %s469 = smul.addr %s468, 192
        %s470 = scalar_lea.vmem [#allocation8], %s469
        // Predicated region
        $region69: #{tpu_custom_call.1} parent=59 // pred_check
          %p471 = pneg %p148
        $region70: #{tpu_custom_call.1} parent=59 // pred_check_branch
          %473 = sbr.rel (%p471) target = $region72
        $region71: #{tpu_custom_call.1} parent=59 // pred_region
          %474 = dma.done %s467, 3072
        $region72: #{tpu_custom_call.1} parent=59 // pred_fallthru
          _
        %s475 = sand.u32 %s26, 1
        %s476 = scalar_lea.sflag [#allocation4], %s475
        %s477 = sand.u32 %s161, 1
        %s478 = smul.addr %s477, 64
        %s479 = scalar_lea.vmem [#allocation9], %s478
        // Predicated region
        $region73: #{tpu_custom_call.1} parent=59 // pred_check
          %p480 = pneg %p174
        $region74: #{tpu_custom_call.1} parent=59 // pred_check_branch
          %482 = sbr.rel (%p480) target = $region76
        $region75: #{tpu_custom_call.1} parent=59 // pred_region
          %483 = dma.done %s476, 1024
        $region76: #{tpu_custom_call.1} parent=59 // pred_fallthru
          _
        %s484 = sand.u32 %s26, 1
        %s485 = scalar_lea.sflag [#allocation4], %s484
        %s486 = sand.u32 %s187, 1
        %s487 = smul.addr %s486, 256
        %s488 = scalar_lea.vmem [#allocation10], %s487
        // Predicated region
        $region77: #{tpu_custom_call.1} parent=59 // pred_check
          %p489 = pneg %p200
        $region78: #{tpu_custom_call.1} parent=59 // pred_check_branch
          %491 = sbr.rel (%p489) target = $region80
        $region79: #{tpu_custom_call.1} parent=59 // pred_region
          %492 = dma.done %s485, 4096
        $region80: #{tpu_custom_call.1} parent=59 // pred_fallthru
          _
        %s493 = sand.u32 %s26, 1
        %s494 = scalar_lea.sflag [#allocation4], %s493
        %s495 = sand.u32 %s213, 1
        %s496 = smul.addr %s495, 256
        %s497 = scalar_lea.vmem [#allocation11], %s496
        // Predicated region
        $region81: #{tpu_custom_call.1} parent=59 // pred_check
          %p498 = pneg %p226
        $region82: #{tpu_custom_call.1} parent=59 // pred_check_branch
          %500 = sbr.rel (%p498) target = $region84
        $region83: #{tpu_custom_call.1} parent=59 // pred_region
          %501 = dma.done %s494, 4096
        $region84: #{tpu_custom_call.1} parent=59 // pred_fallthru
          _
        %s502 = smul.u32 2, %s30
        %p503 = scmp.lt.s32.totalorder %s502, 3
        %s504 = scalar_select %p503, %s502, 3
        %s505 = smul.addr %s504, 8
        %s506 = scalar_lea.vmem %s0, %s505
        %p507 = pneg %p59
        %p508 = pneg %p56
        %p509 = pneg %p80
        %p510 = pneg %p77
        %p511 = pneg %p101
        %p512 = pneg %p98
        %p513 = pneg %p122
        %p514 = pneg %p119
        %s515 = sand.u32 %s26, 1
        %s516 = scalar_lea.sflag [#allocation4], %s515
        %s517 = sand.u32 %s135, 1
        %s518 = smul.addr %s517, 192
        %s519 = scalar_lea.vmem [#allocation8], %s518
        %p520 = pneg %p148
        %p521 = pneg %p145
        %s522 = sand.u32 %s26, 1
        %s523 = scalar_lea.sflag [#allocation4], %s522
        %s524 = sand.u32 %s161, 1
        %s525 = smul.addr %s524, 64
        %s526 = scalar_lea.vmem [#allocation9], %s525
        %p527 = pneg %p174
        %p528 = pneg %p171
        %s529 = sand.u32 %s26, 1
        %s530 = scalar_lea.sflag [#allocation4], %s529
        %s531 = sand.u32 %s187, 1
        %s532 = smul.addr %s531, 256
        %s533 = scalar_lea.vmem [#allocation10], %s532
        %p534 = pneg %p200
        %p535 = pneg %p197
        %s536 = sand.u32 %s26, 1
        %s537 = scalar_lea.sflag [#allocation4], %s536
        %s538 = sand.u32 %s213, 1
        %s539 = smul.addr %s538, 256
        %s540 = scalar_lea.vmem [#allocation11], %s539
        %p541 = pneg %p226
        %p542 = pneg %p223
        %p543 = scmp.lt.s32.totalorder %s31, 1
        %s544 = scalar_select %p543, %s31, 1
        %s545 = smul.addr %s544, 4
        %s546 = smul.addr %s545, 8
        %s547 = scalar_lea.vmem %s8, %s546
        %p548 = pneg %p252
        %p549 = pneg %p249
        %p550 = pneg %p273
        %p551 = pneg %p270
        %p552 = pneg %p299
        %p553 = pneg %p296
        %s554 = sand.u32 %s286, 1
        %s555 = scalar_lea.sflag [#allocation5], %s554
        %s556 = sand.u32 %s286, 1
        %s557 = smul.addr %s556, 16
        %s558 = scalar_lea.vmem [#allocation12], %s557
        %s559 = smul.u32 2, %s30
        %p560 = scmp.lt.s32.totalorder %s559, 3
        %s561 = scalar_select %p560, %s559, 3
        %s562 = smul.addr %s561, 8
        %s563 = scalar_lea.vmem %s0, %s562
        %s564 = smul.u32 2, %s30
        %p565 = scmp.lt.s32.totalorder %s31, 1
        %s566 = scalar_select %p565, %s31, 1
        %s567 = smul.addr %s566, 4
        %s568 = smul.addr %s567, 8
        %s569 = scalar_lea.vmem %s8, %s568
        %s570 = smul.u32 2, %s30
        %p572 = scmp.eq.s32.totalorder %s31, 0
        // Predicated region
        $region85: #{tpu_custom_call.1} parent=59 // pred_check
          %p573 = pneg %p572
        $region86: #{tpu_custom_call.1} parent=59 // pred_check_branch
          %575 = sbr.rel (%p573) target = $region88
        $region87: #{tpu_custom_call.1} parent=59 // pred_region
          %v576 = vld [vmem:[%s563] sm:$0xff]
          %v577 = vld [vmem:[%s563 + $0x8] sm:$0xff]
          %v578 = vpack.c.bf16 %v577, %v576
          %v579 = vld [vmem:[%s1] sm:$0x3]
          %v580 = vld [vmem:[#allocation3] sm:$0xff]
          %v581 = vld [vmem:[#allocation3 + $0x8] sm:$0xff]
          %vm582 = vcmask 31744
          %v584 = vsel %vm582, %v578, 0
          %vm586 = vcmask 1041408
          %v588 = vsel %vm586, %v579, 0
          %590 = vmatprep.subr.bf16.mxu0 0
          %591 = vmatpush1.bf16.msra.mxu0 %v588
          %592 = vmatprep.subr.bf16.mxu0 0
          %593 = vmatpush1.bf16.msra.mxu0 0
          %594 = vmatprep.subr.bf16.mxu0 0
          %595 = vmatpush1.bf16.msra.mxu0 0
          %596 = vmatprep.subr.bf16.mxu0 0
          %597 = vmatpush1.bf16.msra.mxu0 0
          %598 = vmatprep.subr.bf16.mxu0 0
          %599 = vmatpush1.bf16.msra.mxu0 0
          %600 = vmatprep.subr.bf16.mxu0 0
          %601 = vmatpush1.bf16.msra.mxu0 0
          %602 = vmatprep.subr.bf16.mxu0 0
          %603 = vmatpush1.bf16.msra.mxu0 0
          %604 = vmatprep.subr.bf16.mxu0 0
          %605 = vmatpush1.bf16.msra.mxu0 0
          %606 = vmatprep.subr.bf16.mxu0 0
          %607 = vmatpush1.bf16.msra.mxu0 0
          %608 = vmatprep.subr.bf16.mxu0 0
          %609 = vmatpush1.bf16.msra.mxu0 0
          %610 = vmatprep.subr.bf16.mxu0 0
          %611 = vmatpush1.bf16.msra.mxu0 0
          %612 = vmatprep.subr.bf16.mxu0 0
          %613 = vmatpush1.bf16.msra.mxu0 0
          %614 = vmatprep.subr.bf16.mxu0 0
          %615 = vmatpush1.bf16.msra.mxu0 0
          %616 = vmatprep.subr.bf16.mxu0 0
          %617 = vmatpush1.bf16.msra.mxu0 0
          %618 = vmatprep.subr.bf16.mxu0 0
          %619 = vmatpush1.bf16.msra.mxu0 0
          %620 = vmatprep.subr.bf16.mxu0 0
          %621 = vmatpush1.bf16.msra.mxu0 0
          %622 = vmatprep.mubr.bf16.mxu0 0
          %623 = vmatmul.mubr.bf16.gmra.mrb[0].mxu0 %v584
          %v624 = vpop.f32.mrb[0].mxu0
          %v625 = vadd.f32 %v580, %v624
          %v626 = vpop.f32.mrb[0].mxu0
          %v627 = vpop.f32.mrb[0].mxu0
          %v628 = vadd.f32 %v581, %v627
          %v629 = vpop.f32.mrb[0].mxu0
          %630 = vdwg.mxu0
          %631 = vst [vmem:[#allocation2] sm:$0xff] %v625
          %632 = vst [vmem:[#allocation2 + $0x8] sm:$0xff] %v628
        $region88: #{tpu_custom_call.1} parent=59 // pred_fallthru
          _
        %v633 = vld [vmem:[%s569] sm:$0xff]
        %v634 = vld [vmem:[%s569 + $0x8] sm:$0xff]
        %v635 = vld [vmem:[%s569 + $0x10] sm:$0xff]
        %v636 = vld [vmem:[%s569 + $0x18] sm:$0xff]
        %v637 = vld [vmem:[#allocation2] sm:$0xff]
        %v638 = vld [vmem:[#allocation2 + $0x8] sm:$0xff]
        %639 = vadd.xlane.f32.xlu0 %v637
        %v640 = vpop.xlane.xlu0 %639
        %641 = vadd.xlane.f32.xlu0 %v638
        %v642 = vpop.xlane.xlu0 %641
        %v643 = vrcp.pop 128.0
        %v644 = vmul.f32 %v640, %v643
        %v645 = vmul.f32 %v642, %v643
        %v646 = vsub.f32 %v637, %v644
        %v647 = vsub.f32 %v638, %v645
        %v648 = vmul.f32 %v646, %v646
        %v649 = vmul.f32 %v647, %v647
        %650 = vadd.xlane.f32.xlu0 %v648
        %v651 = vpop.xlane.xlu0 %650
        %652 = vadd.xlane.f32.xlu0 %v649
        %v653 = vpop.xlane.xlu0 %652
        %v654 = vmul.f32 %v651, %v643
        %v655 = vmul.f32 %v653, %v643
        %v656 = vadd.f32 %v654, 1e-05
        %v657 = vadd.f32 %v655, 1e-05
        %v658 = vrsqrt.pop %v656
        %v659 = vrsqrt.pop %v657
        %v660 = vmul.f32 %v646, %v658
        %v661 = vmul.f32 %v647, %v659
        %v662 = vlaneseq
        %v663 = vshrl.u32 %v662, 7
        %v664 = vsub.s32 0, %v663
        %v665 = vrot.slane %v633, %v664
        %v666 = vmul.f32 %v660, %v665
        %v667 = vmul.f32 %v661, %v665
        %v668 = vlaneseq
        %v669 = vshrl.u32 %v668, 7
        %v670 = vsub.s32 1, %v669
        %v671 = vrot.slane %v633, %v670
        %v672 = vadd.f32 %v666, %v671
        %v673 = vadd.f32 %v667, %v671
        %v674 = vpack.c.bf16 %v673, %v672
        %v675 = vld [vmem:[%s470] sm:$0xff]
        %v676 = vld [vmem:[%s470 + $0x8] sm:$0xf]
        %v677 = vld [vmem:[%s470 + $0xc] sm:$0xff]
        %v678 = vld [vmem:[%s470 + $0x14] sm:$0xf]
        %v679 = vld [vmem:[%s470 + $0x18] sm:$0xff]
        %v680 = vld [vmem:[%s470 + $0x20] sm:$0xf]
        %v681 = vld [vmem:[%s470 + $0x24] sm:$0xff]
        %v682 = vld [vmem:[%s470 + $0x2c] sm:$0xf]
        %v683 = vld [vmem:[%s470 + $0x30] sm:$0xff]
        %v684 = vld [vmem:[%s470 + $0x38] sm:$0xf]
        %v685 = vld [vmem:[%s470 + $0x3c] sm:$0xff]
        %v686 = vld [vmem:[%s470 + $0x44] sm:$0xf]
        %v687 = vld [vmem:[%s470 + $0x48] sm:$0xff]
        %v688 = vld [vmem:[%s470 + $0x50] sm:$0xf]
        %v689 = vld [vmem:[%s470 + $0x54] sm:$0xff]
        %v690 = vld [vmem:[%s470 + $0x5c] sm:$0xf]
        %v691 = vld [vmem:[%s470 + $0x60] sm:$0xff]
        %v692 = vld [vmem:[%s470 + $0x68] sm:$0xf]
        %v693 = vld [vmem:[%s470 + $0x6c] sm:$0xff]
        %v694 = vld [vmem:[%s470 + $0x74] sm:$0xf]
        %v695 = vld [vmem:[%s470 + $0x78] sm:$0xff]
        %v696 = vld [vmem:[%s470 + $0x80] sm:$0xf]
        %v697 = vld [vmem:[%s470 + $0x84] sm:$0xff]
        %v698 = vld [vmem:[%s470 + $0x8c] sm:$0xf]
        %v699 = vld [vmem:[%s470 + $0x90] sm:$0xff]
        %v700 = vld [vmem:[%s470 + $0x98] sm:$0xf]
        %v701 = vld [vmem:[%s470 + $0x9c] sm:$0xff]
        %v702 = vld [vmem:[%s470 + $0xa4] sm:$0xf]
        %v703 = vld [vmem:[%s470 + $0xa8] sm:$0xff]
        %v704 = vld [vmem:[%s470 + $0xb0] sm:$0xf]
        %v705 = vld [vmem:[%s470 + $0xb4] sm:$0xff]
        %v706 = vld [vmem:[%s470 + $0xbc] sm:$0xf]
        %v707 = vlaneseq
        %v708 = vshrl.u32 %v707, 7
        %v709 = vsub.s32 6, %v708
        %v710 = vrot.slane %v633, %v709
        %v711 = vlaneseq
        %v712 = vshrl.u32 %v711, 7
        %v713 = vsub.s32 6, %v712
        %v714 = vrot.slane %v634, %v713
        %v715 = vlaneseq
        %v716 = vshrl.u32 %v715, 7
        %v717 = vsub.s32 6, %v716
        %v718 = vrot.slane %v635, %v717
        %v751 = vunpack.c.l.b16 %v675
        %v752 = vunpack.c.h.b16 %v675
        %v753 = vunpack.c.l.b16 %v676
        %v754 = vunpack.c.l.b16 %v677
        %v755 = vunpack.c.h.b16 %v677
        %v756 = vunpack.c.l.b16 %v678
        %v757 = vunpack.c.l.b16 %v679
        %v758 = vunpack.c.h.b16 %v679
        %v759 = vunpack.c.l.b16 %v680
        %v760 = vunpack.c.l.b16 %v681
        %v761 = vunpack.c.h.b16 %v681
        %v762 = vunpack.c.l.b16 %v682
        %v763 = vunpack.c.l.b16 %v683
        %v764 = vunpack.c.h.b16 %v683
        %v765 = vunpack.c.l.b16 %v684
        %v766 = vunpack.c.l.b16 %v685
        %v767 = vunpack.c.h.b16 %v685
        %v768 = vunpack.c.l.b16 %v686
        %v769 = vunpack.c.l.b16 %v687
        %v770 = vunpack.c.h.b16 %v687
        %v771 = vunpack.c.l.b16 %v688
        %v772 = vunpack.c.l.b16 %v689
        %v773 = vunpack.c.h.b16 %v689
        %v774 = vunpack.c.l.b16 %v690
        %v775 = vunpack.c.l.b16 %v691
        %v776 = vunpack.c.h.b16 %v691
        %v777 = vunpack.c.l.b16 %v692
        %v778 = vunpack.c.l.b16 %v693
        %v779 = vunpack.c.h.b16 %v693
        %v780 = vunpack.c.l.b16 %v694
        %v781 = vunpack.c.l.b16 %v695
        %v782 = vunpack.c.h.b16 %v695
        %v783 = vunpack.c.l.b16 %v696
        %v784 = vunpack.c.l.b16 %v697
        %v785 = vunpack.c.h.b16 %v697
        %v786 = vunpack.c.l.b16 %v698
        %v787 = vunpack.c.l.b16 %v699
        %v788 = vunpack.c.h.b16 %v699
        %v789 = vunpack.c.l.b16 %v700
        %v790 = vunpack.c.l.b16 %v701
        %v791 = vunpack.c.h.b16 %v701
        %v792 = vunpack.c.l.b16 %v702
        %v793 = vunpack.c.l.b16 %v703
        %v794 = vunpack.c.h.b16 %v703
        %v795 = vunpack.c.l.b16 %v704
        %v796 = vunpack.c.l.b16 %v705
        %v797 = vunpack.c.h.b16 %v705
        %v798 = vunpack.c.l.b16 %v706
        %v799 = vpack.c.b16 %v754, %v751
        %v800 = vpack.c.b16 %v755, %v752
        %v801 = vpack.c.b16 %v756, %v753
        %v802 = vpack.c.b16 %v760, %v757
        %v803 = vpack.c.b16 %v761, %v758
        %v804 = vpack.c.b16 %v762, %v759
        %v805 = vpack.c.b16 %v766, %v763
        %v806 = vpack.c.b16 %v767, %v764
        %v807 = vpack.c.b16 %v768, %v765
        %v808 = vpack.c.b16 %v772, %v769
        %v809 = vpack.c.b16 %v773, %v770
        %v810 = vpack.c.b16 %v774, %v771
        %v811 = vpack.c.b16 %v778, %v775
        %v812 = vpack.c.b16 %v779, %v776
        %v813 = vpack.c.b16 %v780, %v777
        %v814 = vpack.c.b16 %v784, %v781
        %v815 = vpack.c.b16 %v785, %v782
        %v816 = vpack.c.b16 %v786, %v783
        %v817 = vpack.c.b16 %v790, %v787
        %v818 = vpack.c.b16 %v791, %v788
        %v819 = vpack.c.b16 %v792, %v789
        %v820 = vpack.c.b16 %v796, %v793
        %v821 = vpack.c.b16 %v797, %v794
        %v822 = vpack.c.b16 %v798, %v795
        %847 = vmatprep.subr.bf16.mxu0 %v800
        %848 = vmatpush1.bf16.msra.mxu0 %v799
        %849 = vmatprep.subr.bf16.mxu0 %v803
        %850 = vmatpush1.bf16.msra.mxu0 %v802
        %851 = vmatprep.subr.bf16.mxu0 %v806
        %852 = vmatpush1.bf16.msra.mxu0 %v805
        %853 = vmatprep.subr.bf16.mxu0 %v809
        %854 = vmatpush1.bf16.msra.mxu0 %v808
        %855 = vmatprep.subr.bf16.mxu0 %v812
        %856 = vmatpush1.bf16.msra.mxu0 %v811
        %857 = vmatprep.subr.bf16.mxu0 %v815
        %858 = vmatpush1.bf16.msra.mxu0 %v814
        %859 = vmatprep.subr.bf16.mxu0 %v818
        %860 = vmatpush1.bf16.msra.mxu0 %v817
        %861 = vmatprep.subr.bf16.mxu0 %v821
        %862 = vmatpush1.bf16.msra.mxu0 %v820
        %863 = vmatprep.subr.bf16.mxu0 0
        %864 = vmatpush1.bf16.msra.mxu0 0
        %865 = vmatprep.subr.bf16.mxu0 0
        %866 = vmatpush1.bf16.msra.mxu0 0
        %867 = vmatprep.subr.bf16.mxu0 0
        %868 = vmatpush1.bf16.msra.mxu0 0
        %869 = vmatprep.subr.bf16.mxu0 0
        %870 = vmatpush1.bf16.msra.mxu0 0
        %871 = vmatprep.subr.bf16.mxu0 0
        %872 = vmatpush1.bf16.msra.mxu0 0
        %873 = vmatprep.subr.bf16.mxu0 0
        %874 = vmatpush1.bf16.msra.mxu0 0
        %875 = vmatprep.subr.bf16.mxu0 0
        %876 = vmatpush1.bf16.msra.mxu0 0
        %877 = vmatprep.subr.bf16.mxu0 0
        %878 = vmatpush1.bf16.msra.mxu0 0
        %879 = vmatprep.mubr.bf16.mxu0 0
        %880 = vmatmul.mubr.bf16.gmra.mrb[0].mxu0 %v674
        %v881 = vpop.f32.mrb[0].mxu0
        %v882 = vadd.f32 %v710, %v881
        %v883 = vpop.f32.mrb[0].mxu0
        %v884 = vadd.f32 %v714, %v883
        %v885 = vpop.f32.mrb[0].mxu0
        %v886 = vadd.f32 %v710, %v885
        %v887 = vpop.f32.mrb[0].mxu0
        %v888 = vadd.f32 %v714, %v887
        %889 = vdwg.mxu0
        %890 = vmatprep.subr.bf16.mxu0 0
        %891 = vmatpush1.bf16.msra.mxu0 %v801
        %892 = vmatprep.subr.bf16.mxu0 0
        %893 = vmatpush1.bf16.msra.mxu0 %v804
        %894 = vmatprep.subr.bf16.mxu0 0
        %895 = vmatpush1.bf16.msra.mxu0 %v807
        %896 = vmatprep.subr.bf16.mxu0 0
        %897 = vmatpush1.bf16.msra.mxu0 %v810
        %898 = vmatprep.subr.bf16.mxu0 0
        %899 = vmatpush1.bf16.msra.mxu0 %v813
        %900 = vmatprep.subr.bf16.mxu0 0
        %901 = vmatpush1.bf16.msra.mxu0 %v816
        %902 = vmatprep.subr.bf16.mxu0 0
        %903 = vmatpush1.bf16.msra.mxu0 %v819
        %904 = vmatprep.subr.bf16.mxu0 0
        %905 = vmatpush1.bf16.msra.mxu0 %v822
        %906 = vmatprep.subr.bf16.mxu0 0
        %907 = vmatpush1.bf16.msra.mxu0 0
        %908 = vmatprep.subr.bf16.mxu0 0
        %909 = vmatpush1.bf16.msra.mxu0 0
        %910 = vmatprep.subr.bf16.mxu0 0
        %911 = vmatpush1.bf16.msra.mxu0 0
        %912 = vmatprep.subr.bf16.mxu0 0
        %913 = vmatpush1.bf16.msra.mxu0 0
        %914 = vmatprep.subr.bf16.mxu0 0
        %915 = vmatpush1.bf16.msra.mxu0 0
        %916 = vmatprep.subr.bf16.mxu0 0
        %917 = vmatpush1.bf16.msra.mxu0 0
        %918 = vmatprep.subr.bf16.mxu0 0
        %919 = vmatpush1.bf16.msra.mxu0 0
        %920 = vmatprep.subr.bf16.mxu0 0
        %921 = vmatpush1.bf16.msra.mxu0 0
        %922 = vmatprep.mubr.bf16.mxu0 0
        %923 = vmatmul.mubr.bf16.gmra.mrb[0].mxu0 %v674
        %v924 = vpop.f32.mrb[0].mxu0
        %v925 = vadd.f32 %v718, %v924
        %v926 = vpop.f32.mrb[0].mxu0
        %v927 = vpop.f32.mrb[0].mxu0
        %v928 = vadd.f32 %v718, %v927
        %v929 = vpop.f32.mrb[0].mxu0
        %930 = vdwg.mxu0
        %v931 = vld [vmem:[#allocation6] sm:$0xff]
        %v932 = vld [vmem:[#allocation6 + $0x8] sm:$0xff]
        %v933 = vpack.c.bf16 %v886, %v882
        %v934 = vpack.c.bf16 %v888, %v884
        %v935 = vpack.c.bf16 %v928, %v925
        %vm936 = vcmask 261120
        %v938 = vsel %vm936, %v933, 0
        %v941 = vsel %vm936, %v934, 0
        %943 = vmatprep.subr.bf16.mxu0 0
        %944 = vmatpush1.bf16.xpose.msra.mxu0 %v941
        %945 = vmatprep.subr.bf16.mxu0 0
        %946 = vmatpush1.bf16.xpose.msra.mxu0 0
        %947 = vmatprep.subr.bf16.mxu0 0
        %948 = vmatpush1.bf16.xpose.msra.mxu0 0
        %949 = vmatprep.subr.bf16.mxu0 0
        %950 = vmatpush1.bf16.xpose.msra.mxu0 0
        %951 = vmatprep.subr.bf16.mxu0 0
        %952 = vmatpush1.bf16.xpose.msra.mxu0 0
        %953 = vmatprep.subr.bf16.mxu0 0
        %954 = vmatpush1.bf16.xpose.msra.mxu0 0
        %955 = vmatprep.subr.bf16.mxu0 0
        %956 = vmatpush1.bf16.xpose.msra.mxu0 0
        %957 = vmatprep.subr.bf16.mxu0 0
        %958 = vmatpush1.bf16.xpose.msra.mxu0 0
        %959 = vmatprep.subr.bf16.mxu0 0
        %960 = vmatpush1.bf16.xpose.msra.mxu0 0
        %961 = vmatprep.subr.bf16.mxu0 0
        %962 = vmatpush1.bf16.xpose.msra.mxu0 0
        %963 = vmatprep.subr.bf16.mxu0 0
        %964 = vmatpush1.bf16.xpose.msra.mxu0 0
        %965 = vmatprep.subr.bf16.mxu0 0
        %966 = vmatpush1.bf16.xpose.msra.mxu0 0
        %967 = vmatprep.subr.bf16.mxu0 0
        %968 = vmatpush1.bf16.xpose.msra.mxu0 0
        %969 = vmatprep.subr.bf16.mxu0 0
        %970 = vmatpush1.bf16.xpose.msra.mxu0 0
        %971 = vmatprep.subr.bf16.mxu0 0
        %972 = vmatpush1.bf16.xpose.msra.mxu0 0
        %973 = vmatprep.subr.bf16.mxu0 0
        %974 = vmatpush1.bf16.xpose.msra.mxu0 0
        %975 = vmatprep.mubr.bf16.mxu0 0
        %976 = vmatmul.mubr.bf16.gmra.mrb[0].mxu0 %v938
        %v977 = vpop.f32.mrb[0].mxu0
        %v978 = vadd.f32 0.0, %v977
        %v979 = vpop.f32.mrb[0].mxu0
        %v980 = vpop.f32.mrb[0].mxu0
        %v981 = vadd.f32 0.0, %v980
        %v982 = vpop.f32.mrb[0].mxu0
        %983 = vdwg.mxu0
        %v984 = vmul.f32 %v978, 0.17677669
        %v985 = vmul.f32 %v981, 0.17677669
        %v986 = vadd.f32 %v984, %v931
        %v987 = vadd.f32 %v985, %v932
        %vm988 = vcmask 130048
        %v989 = vsel %vm988, %v986, -inf
        %990 = vmax.xlane.f32.xlu0 %v989
        %v991 = vpop.xlane.xlu0 %990
        %v992 = vsel %vm988, %v987, -inf
        %993 = vmax.xlane.f32.xlu0 %v992
        %v994 = vpop.xlane.xlu0 %993
        %v995 = vsub.f32 %v986, %v991
        %v996 = vsub.f32 %v987, %v994
        %v997 = vmul.f32 %v995, 1.442695
        %v998 = vpow.pop %v997
        %v999 = vmul.f32 %v996, 1.442695
        %v1000 = vpow.pop %v999
        %v1001 = vsel %vm988, %v998, 0.0
        %1002 = vadd.xlane.f32.xlu0 %v1001
        %v1003 = vpop.xlane.xlu0 %1002
        %v1004 = vsel %vm988, %v1000, 0.0
        %1005 = vadd.xlane.f32.xlu0 %v1004
        %v1006 = vpop.xlane.xlu0 %1005
        %v1007 = vrcp.pop %v1003
        %v1008 = vmul.f32 %v998, %v1007
        %v1009 = vrcp.pop %v1006
        %v1010 = vmul.f32 %v1000, %v1009
        %v1011 = vpack.c.bf16 %v1010, %v1008
        %v1013 = vsel %vm988, %v1011, 0
        %1015 = vmatprep.subr.bf16.mxu0 0
        %1016 = vmatpush1.bf16.msra.mxu0 %v935
        %1017 = vmatprep.subr.bf16.mxu0 0
        %1018 = vmatpush1.bf16.msra.mxu0 0
        %1019 = vmatprep.subr.bf16.mxu0 0
        %1020 = vmatpush1.bf16.msra.mxu0 0
        %1021 = vmatprep.subr.bf16.mxu0 0
        %1022 = vmatpush1.bf16.msra.mxu0 0
        %1023 = vmatprep.subr.bf16.mxu0 0
        %1024 = vmatpush1.bf16.msra.mxu0 0
        %1025 = vmatprep.subr.bf16.mxu0 0
        %1026 = vmatpush1.bf16.msra.mxu0 0
        %1027 = vmatprep.subr.bf16.mxu0 0
        %1028 = vmatpush1.bf16.msra.mxu0 0
        %1029 = vmatprep.subr.bf16.mxu0 0
        %1030 = vmatpush1.bf16.msra.mxu0 0
        %1031 = vmatprep.subr.bf16.mxu0 0
        %1032 = vmatpush1.bf16.msra.mxu0 0
        %1033 = vmatprep.subr.bf16.mxu0 0
        %1034 = vmatpush1.bf16.msra.mxu0 0
        %1035 = vmatprep.subr.bf16.mxu0 0
        %1036 = vmatpush1.bf16.msra.mxu0 0
        %1037 = vmatprep.subr.bf16.mxu0 0
        %1038 = vmatpush1.bf16.msra.mxu0 0
        %1039 = vmatprep.subr.bf16.mxu0 0
        %1040 = vmatpush1.bf16.msra.mxu0 0
        %1041 = vmatprep.subr.bf16.mxu0 0
        %1042 = vmatpush1.bf16.msra.mxu0 0
        %1043 = vmatprep.subr.bf16.mxu0 0
        %1044 = vmatpush1.bf16.msra.mxu0 0
        %1045 = vmatprep.subr.bf16.mxu0 0
        %1046 = vmatpush1.bf16.msra.mxu0 0
        %1047 = vmatprep.mubr.bf16.mxu0 0
        %1048 = vmatmul.mubr.bf16.gmra.mrb[0].mxu0 %v1013
        %v1049 = vpop.f32.mrb[0].mxu0
        %v1050 = vadd.f32 0.0, %v1049
        %v1051 = vpop.f32.mrb[0].mxu0
        %v1052 = vpop.f32.mrb[0].mxu0
        %v1053 = vadd.f32 0.0, %v1052
        %v1054 = vpop.f32.mrb[0].mxu0
        %1055 = vdwg.mxu0
        %1057 = vrot.lane.b32.xlu0 %v933, 96
        %v1058 = vpop.permute.xlu0 %1057
        %1060 = vrot.lane.b32.xlu0 %v934, 96
        %v1061 = vpop.permute.xlu0 %1060
        %v1063 = vsel %vm936, %v1058, 0
        %v1066 = vsel %vm936, %v1061, 0
        %1068 = vmatprep.subr.bf16.mxu0 0
        %1069 = vmatpush1.bf16.xpose.msra.mxu0 %v1066
        %1070 = vmatprep.subr.bf16.mxu0 0
        %1071 = vmatpush1.bf16.xpose.msra.mxu0 0
        %1072 = vmatprep.subr.bf16.mxu0 0
        %1073 = vmatpush1.bf16.xpose.msra.mxu0 0
        %1074 = vmatprep.subr.bf16.mxu0 0
        %1075 = vmatpush1.bf16.xpose.msra.mxu0 0
        %1076 = vmatprep.subr.bf16.mxu0 0
        %1077 = vmatpush1.bf16.xpose.msra.mxu0 0
        %1078 = vmatprep.subr.bf16.mxu0 0
        %1079 = vmatpush1.bf16.xpose.msra.mxu0 0
        %1080 = vmatprep.subr.bf16.mxu0 0
        %1081 = vmatpush1.bf16.xpose.msra.mxu0 0
        %1082 = vmatprep.subr.bf16.mxu0 0
        %1083 = vmatpush1.bf16.xpose.msra.mxu0 0
        %1084 = vmatprep.subr.bf16.mxu0 0
        %1085 = vmatpush1.bf16.xpose.msra.mxu0 0
        %1086 = vmatprep.subr.bf16.mxu0 0
        %1087 = vmatpush1.bf16.xpose.msra.mxu0 0
        %1088 = vmatprep.subr.bf16.mxu0 0
        %1089 = vmatpush1.bf16.xpose.msra.mxu0 0
        %1090 = vmatprep.subr.bf16.mxu0 0
        %1091 = vmatpush1.bf16.xpose.msra.mxu0 0
        %1092 = vmatprep.subr.bf16.mxu0 0
        %1093 = vmatpush1.bf16.xpose.msra.mxu0 0
        %1094 = vmatprep.subr.bf16.mxu0 0
        %1095 = vmatpush1.bf16.xpose.msra.mxu0 0
        %1096 = vmatprep.subr.bf16.mxu0 0
        %1097 = vmatpush1.bf16.xpose.msra.mxu0 0
        %1098 = vmatprep.subr.bf16.mxu0 0
        %1099 = vmatpush1.bf16.xpose.msra.mxu0 0
        %1100 = vmatprep.mubr.bf16.mxu0 0
        %1101 = vmatmul.mubr.bf16.gmra.mrb[0].mxu0 %v1063
        %v1102 = vpop.f32.mrb[0].mxu0
        %v1103 = vadd.f32 0.0, %v1102
        %v1104 = vpop.f32.mrb[0].mxu0
        %v1105 = vpop.f32.mrb[0].mxu0
        %v1106 = vadd.f32 0.0, %v1105
        %v1107 = vpop.f32.mrb[0].mxu0
        %1108 = vdwg.mxu0
        %v1109 = vmul.f32 %v1103, 0.17677669
        %v1110 = vmul.f32 %v1106, 0.17677669
        %v1111 = vadd.f32 %v1109, %v931
        %v1112 = vadd.f32 %v1110, %v932
        %v1113 = vsel %vm988, %v1111, -inf
        %1114 = vmax.xlane.f32.xlu0 %v1113
        %v1115 = vpop.xlane.xlu0 %1114
        %v1116 = vsel %vm988, %v1112, -inf
        %1117 = vmax.xlane.f32.xlu0 %v1116
        %v1118 = vpop.xlane.xlu0 %1117
        %v1119 = vsub.f32 %v1111, %v1115
        %v1120 = vsub.f32 %v1112, %v1118
        %v1121 = vmul.f32 %v1119, 1.442695
        %v1122 = vpow.pop %v1121
        %v1123 = vmul.f32 %v1120, 1.442695
        %v1124 = vpow.pop %v1123
        %v1125 = vsel %vm988, %v1122, 0.0
        %1126 = vadd.xlane.f32.xlu0 %v1125
        %v1127 = vpop.xlane.xlu0 %1126
        %v1128 = vsel %vm988, %v1124, 0.0
        %1129 = vadd.xlane.f32.xlu0 %v1128
        %v1130 = vpop.xlane.xlu0 %1129
        %v1131 = vrcp.pop %v1127
        %v1132 = vmul.f32 %v1122, %v1131
        %v1133 = vrcp.pop %v1130
        %v1134 = vmul.f32 %v1124, %v1133
        %v1135 = vpack.c.bf16 %v1134, %v1132
        %1137 = vrot.lane.b32.xlu0 %v935, 96
        %v1138 = vpop.permute.xlu0 %1137
        %v1141 = vsel %vm988, %v1135, 0
        %1143 = vmatprep.subr.bf16.mxu0 0
        %1144 = vmatpush1.bf16.msra.mxu0 %v1138
        %1145 = vmatprep.subr.bf16.mxu0 0
        %1146 = vmatpush1.bf16.msra.mxu0 0
        %1147 = vmatprep.subr.bf16.mxu0 0
        %1148 = vmatpush1.bf16.msra.mxu0 0
        %1149 = vmatprep.subr.bf16.mxu0 0
        %1150 = vmatpush1.bf16.msra.mxu0 0
        %1151 = vmatprep.subr.bf16.mxu0 0
        %1152 = vmatpush1.bf16.msra.mxu0 0
        %1153 = vmatprep.subr.bf16.mxu0 0
        %1154 = vmatpush1.bf16.msra.mxu0 0
        %1155 = vmatprep.subr.bf16.mxu0 0
        %1156 = vmatpush1.bf16.msra.mxu0 0
        %1157 = vmatprep.subr.bf16.mxu0 0
        %1158 = vmatpush1.bf16.msra.mxu0 0
        %1159 = vmatprep.subr.bf16.mxu0 0
        %1160 = vmatpush1.bf16.msra.mxu0 0
        %1161 = vmatprep.subr.bf16.mxu0 0
        %1162 = vmatpush1.bf16.msra.mxu0 0
        %1163 = vmatprep.subr.bf16.mxu0 0
        %1164 = vmatpush1.bf16.msra.mxu0 0
        %1165 = vmatprep.subr.bf16.mxu0 0
        %1166 = vmatpush1.bf16.msra.mxu0 0
        %1167 = vmatprep.subr.bf16.mxu0 0
        %1168 = vmatpush1.bf16.msra.mxu0 0
        %1169 = vmatprep.subr.bf16.mxu0 0
        %1170 = vmatpush1.bf16.msra.mxu0 0
        %1171 = vmatprep.subr.bf16.mxu0 0
        %1172 = vmatpush1.bf16.msra.mxu0 0
        %1173 = vmatprep.subr.bf16.mxu0 0
        %1174 = vmatpush1.bf16.msra.mxu0 0
        %1175 = vmatprep.mubr.bf16.mxu0 0
        %1176 = vmatmul.mubr.bf16.gmra.mrb[0].mxu0 %v1141
        %v1177 = vpop.f32.mrb[0].mxu0
        %v1178 = vadd.f32 0.0, %v1177
        %v1179 = vpop.f32.mrb[0].mxu0
        %v1180 = vpop.f32.mrb[0].mxu0
        %v1181 = vadd.f32 0.0, %v1180
        %v1182 = vpop.f32.mrb[0].mxu0
        %1183 = vdwg.mxu0
        %1184 = vrot.lane.b32.xlu0 %v933, 64
        %v1185 = vpop.permute.xlu0 %1184
        %1186 = vrot.lane.b32.xlu0 %v934, 64
        %v1187 = vpop.permute.xlu0 %1186
        %v1189 = vsel %vm936, %v1185, 0
        %v1192 = vsel %vm936, %v1187, 0
        %1194 = vmatprep.subr.bf16.mxu0 0
        %1195 = vmatpush1.bf16.xpose.msra.mxu0 %v1192
        %1196 = vmatprep.subr.bf16.mxu0 0
        %1197 = vmatpush1.bf16.xpose.msra.mxu0 0
        %1198 = vmatprep.subr.bf16.mxu0 0
        %1199 = vmatpush1.bf16.xpose.msra.mxu0 0
        %1200 = vmatprep.subr.bf16.mxu0 0
        %1201 = vmatpush1.bf16.xpose.msra.mxu0 0
        %1202 = vmatprep.subr.bf16.mxu0 0
        %1203 = vmatpush1.bf16.xpose.msra.mxu0 0
        %1204 = vmatprep.subr.bf16.mxu0 0
        %1205 = vmatpush1.bf16.xpose.msra.mxu0 0
        %1206 = vmatprep.subr.bf16.mxu0 0
        %1207 = vmatpush1.bf16.xpose.msra.mxu0 0
        %1208 = vmatprep.subr.bf16.mxu0 0
        %1209 = vmatpush1.bf16.xpose.msra.mxu0 0
        %1210 = vmatprep.subr.bf16.mxu0 0
        %1211 = vmatpush1.bf16.xpose.msra.mxu0 0
        %1212 = vmatprep.subr.bf16.mxu0 0
        %1213 = vmatpush1.bf16.xpose.msra.mxu0 0
        %1214 = vmatprep.subr.bf16.mxu0 0
        %1215 = vmatpush1.bf16.xpose.msra.mxu0 0
        %1216 = vmatprep.subr.bf16.mxu0 0
        %1217 = vmatpush1.bf16.xpose.msra.mxu0 0
        %1218 = vmatprep.subr.bf16.mxu0 0
        %1219 = vmatpush1.bf16.xpose.msra.mxu0 0
        %1220 = vmatprep.subr.bf16.mxu0 0
        %1221 = vmatpush1.bf16.xpose.msra.mxu0 0
        %1222 = vmatprep.subr.bf16.mxu0 0
        %1223 = vmatpush1.bf16.xpose.msra.mxu0 0
        %1224 = vmatprep.subr.bf16.mxu0 0
        %1225 = vmatpush1.bf16.xpose.msra.mxu0 0
        %1226 = vmatprep.mubr.bf16.mxu0 0
        %1227 = vmatmul.mubr.bf16.gmra.mrb[0].mxu0 %v1189
        %v1228 = vpop.f32.mrb[0].mxu0
        %v1229 = vadd.f32 0.0, %v1228
        %v1230 = vpop.f32.mrb[0].mxu0
        %v1231 = vpop.f32.mrb[0].mxu0
        %v1232 = vadd.f32 0.0, %v1231
        %v1233 = vpop.f32.mrb[0].mxu0
        %1234 = vdwg.mxu0
        %v1235 = vmul.f32 %v1229, 0.17677669
        %v1236 = vmul.f32 %v1232, 0.17677669
        %v1237 = vadd.f32 %v1235, %v931
        %v1238 = vadd.f32 %v1236, %v932
        %v1239 = vsel %vm988, %v1237, -inf
        %1240 = vmax.xlane.f32.xlu0 %v1239
        %v1241 = vpop.xlane.xlu0 %1240
        %v1242 = vsel %vm988, %v1238, -inf
        %1243 = vmax.xlane.f32.xlu0 %v1242
        %v1244 = vpop.xlane.xlu0 %1243
        %v1245 = vsub.f32 %v1237, %v1241
        %v1246 = vsub.f32 %v1238, %v1244
        %v1247 = vmul.f32 %v1245, 1.442695
        %v1248 = vpow.pop %v1247
        %v1249 = vmul.f32 %v1246, 1.442695
        %v1250 = vpow.pop %v1249
        %v1251 = vsel %vm988, %v1248, 0.0
        %1252 = vadd.xlane.f32.xlu0 %v1251
        %v1253 = vpop.xlane.xlu0 %1252
        %v1254 = vsel %vm988, %v1250, 0.0
        %1255 = vadd.xlane.f32.xlu0 %v1254
        %v1256 = vpop.xlane.xlu0 %1255
        %v1257 = vrcp.pop %v1253
        %v1258 = vmul.f32 %v1248, %v1257
        %v1259 = vrcp.pop %v1256
        %v1260 = vmul.f32 %v1250, %v1259
        %v1261 = vpack.c.bf16 %v1260, %v1258
        %1262 = vrot.lane.b32.xlu0 %v935, 64
        %v1263 = vpop.permute.xlu0 %1262
        %v1266 = vsel %vm988, %v1261, 0
        %1268 = vmatprep.subr.bf16.mxu0 0
        %1269 = vmatpush1.bf16.msra.mxu0 %v1263
        %1270 = vmatprep.subr.bf16.mxu0 0
        %1271 = vmatpush1.bf16.msra.mxu0 0
        %1272 = vmatprep.subr.bf16.mxu0 0
        %1273 = vmatpush1.bf16.msra.mxu0 0
        %1274 = vmatprep.subr.bf16.mxu0 0
        %1275 = vmatpush1.bf16.msra.mxu0 0
        %1276 = vmatprep.subr.bf16.mxu0 0
        %1277 = vmatpush1.bf16.msra.mxu0 0
        %1278 = vmatprep.subr.bf16.mxu0 0
        %1279 = vmatpush1.bf16.msra.mxu0 0
        %1280 = vmatprep.subr.bf16.mxu0 0
        %1281 = vmatpush1.bf16.msra.mxu0 0
        %1282 = vmatprep.subr.bf16.mxu0 0
        %1283 = vmatpush1.bf16.msra.mxu0 0
        %1284 = vmatprep.subr.bf16.mxu0 0
        %1285 = vmatpush1.bf16.msra.mxu0 0
        %1286 = vmatprep.subr.bf16.mxu0 0
        %1287 = vmatpush1.bf16.msra.mxu0 0
        %1288 = vmatprep.subr.bf16.mxu0 0
        %1289 = vmatpush1.bf16.msra.mxu0 0
        %1290 = vmatprep.subr.bf16.mxu0 0
        %1291 = vmatpush1.bf16.msra.mxu0 0
        %1292 = vmatprep.subr.bf16.mxu0 0
        %1293 = vmatpush1.bf16.msra.mxu0 0
        %1294 = vmatprep.subr.bf16.mxu0 0
        %1295 = vmatpush1.bf16.msra.mxu0 0
        %1296 = vmatprep.subr.bf16.mxu0 0
        %1297 = vmatpush1.bf16.msra.mxu0 0
        %1298 = vmatprep.subr.bf16.mxu0 0
        %1299 = vmatpush1.bf16.msra.mxu0 0
        %1300 = vmatprep.mubr.bf16.mxu0 0
        %1301 = vmatmul.mubr.bf16.gmra.mrb[0].mxu0 %v1266
        %v1302 = vpop.f32.mrb[0].mxu0
        %v1303 = vadd.f32 0.0, %v1302
        %v1304 = vpop.f32.mrb[0].mxu0
        %v1305 = vpop.f32.mrb[0].mxu0
        %v1306 = vadd.f32 0.0, %v1305
        %v1307 = vpop.f32.mrb[0].mxu0
        %1308 = vdwg.mxu0
        %1309 = vrot.lane.b32.xlu0 %v933, 32
        %v1310 = vpop.permute.xlu0 %1309
        %1311 = vrot.lane.b32.xlu0 %v934, 32
        %v1312 = vpop.permute.xlu0 %1311
        %v1314 = vsel %vm936, %v1310, 0
        %v1317 = vsel %vm936, %v1312, 0
        %1319 = vmatprep.subr.bf16.mxu0 0
        %1320 = vmatpush1.bf16.xpose.msra.mxu0 %v1317
        %1321 = vmatprep.subr.bf16.mxu0 0
        %1322 = vmatpush1.bf16.xpose.msra.mxu0 0
        %1323 = vmatprep.subr.bf16.mxu0 0
        %1324 = vmatpush1.bf16.xpose.msra.mxu0 0
        %1325 = vmatprep.subr.bf16.mxu0 0
        %1326 = vmatpush1.bf16.xpose.msra.mxu0 0
        %1327 = vmatprep.subr.bf16.mxu0 0
        %1328 = vmatpush1.bf16.xpose.msra.mxu0 0
        %1329 = vmatprep.subr.bf16.mxu0 0
        %1330 = vmatpush1.bf16.xpose.msra.mxu0 0
        %1331 = vmatprep.subr.bf16.mxu0 0
        %1332 = vmatpush1.bf16.xpose.msra.mxu0 0
        %1333 = vmatprep.subr.bf16.mxu0 0
        %1334 = vmatpush1.bf16.xpose.msra.mxu0 0
        %1335 = vmatprep.subr.bf16.mxu0 0
        %1336 = vmatpush1.bf16.xpose.msra.mxu0 0
        %1337 = vmatprep.subr.bf16.mxu0 0
        %1338 = vmatpush1.bf16.xpose.msra.mxu0 0
        %1339 = vmatprep.subr.bf16.mxu0 0
        %1340 = vmatpush1.bf16.xpose.msra.mxu0 0
        %1341 = vmatprep.subr.bf16.mxu0 0
        %1342 = vmatpush1.bf16.xpose.msra.mxu0 0
        %1343 = vmatprep.subr.bf16.mxu0 0
        %1344 = vmatpush1.bf16.xpose.msra.mxu0 0
        %1345 = vmatprep.subr.bf16.mxu0 0
        %1346 = vmatpush1.bf16.xpose.msra.mxu0 0
        %1347 = vmatprep.subr.bf16.mxu0 0
        %1348 = vmatpush1.bf16.xpose.msra.mxu0 0
        %1349 = vmatprep.subr.bf16.mxu0 0
        %1350 = vmatpush1.bf16.xpose.msra.mxu0 0
        %1351 = vmatprep.mubr.bf16.mxu0 0
        %1352 = vmatmul.mubr.bf16.gmra.mrb[0].mxu0 %v1314
        %v1353 = vpop.f32.mrb[0].mxu0
        %v1354 = vadd.f32 0.0, %v1353
        %v1355 = vpop.f32.mrb[0].mxu0
        %v1356 = vpop.f32.mrb[0].mxu0
        %v1357 = vadd.f32 0.0, %v1356
        %v1358 = vpop.f32.mrb[0].mxu0
        %1359 = vdwg.mxu0
        %v1360 = vmul.f32 %v1354, 0.17677669
        %v1361 = vmul.f32 %v1357, 0.17677669
        %v1362 = vadd.f32 %v1360, %v931
        %v1363 = vadd.f32 %v1361, %v932
        %v1364 = vsel %vm988, %v1362, -inf
        %1365 = vmax.xlane.f32.xlu0 %v1364
        %v1366 = vpop.xlane.xlu0 %1365
        %v1367 = vsel %vm988, %v1363, -inf
        %1368 = vmax.xlane.f32.xlu0 %v1367
        %v1369 = vpop.xlane.xlu0 %1368
        %v1370 = vsub.f32 %v1362, %v1366
        %v1371 = vsub.f32 %v1363, %v1369
        %v1372 = vmul.f32 %v1370, 1.442695
        %v1373 = vpow.pop %v1372
        %v1374 = vmul.f32 %v1371, 1.442695
        %v1375 = vpow.pop %v1374
        %v1376 = vsel %vm988, %v1373, 0.0
        %1377 = vadd.xlane.f32.xlu0 %v1376
        %v1378 = vpop.xlane.xlu0 %1377
        %v1379 = vsel %vm988, %v1375, 0.0
        %1380 = vadd.xlane.f32.xlu0 %v1379
        %v1381 = vpop.xlane.xlu0 %1380
        %v1382 = vrcp.pop %v1378
        %v1383 = vmul.f32 %v1373, %v1382
        %v1384 = vrcp.pop %v1381
        %v1385 = vmul.f32 %v1375, %v1384
        %v1386 = vpack.c.bf16 %v1385, %v1383
        %1387 = vrot.lane.b32.xlu0 %v935, 32
        %v1388 = vpop.permute.xlu0 %1387
        %v1391 = vsel %vm988, %v1386, 0
        %1393 = vmatprep.subr.bf16.mxu0 0
        %1394 = vmatpush1.bf16.msra.mxu0 %v1388
        %1395 = vmatprep.subr.bf16.mxu0 0
        %1396 = vmatpush1.bf16.msra.mxu0 0
        %1397 = vmatprep.subr.bf16.mxu0 0
        %1398 = vmatpush1.bf16.msra.mxu0 0
        %1399 = vmatprep.subr.bf16.mxu0 0
        %1400 = vmatpush1.bf16.msra.mxu0 0
        %1401 = vmatprep.subr.bf16.mxu0 0
        %1402 = vmatpush1.bf16.msra.mxu0 0
        %1403 = vmatprep.subr.bf16.mxu0 0
        %1404 = vmatpush1.bf16.msra.mxu0 0
        %1405 = vmatprep.subr.bf16.mxu0 0
        %1406 = vmatpush1.bf16.msra.mxu0 0
        %1407 = vmatprep.subr.bf16.mxu0 0
        %1408 = vmatpush1.bf16.msra.mxu0 0
        %1409 = vmatprep.subr.bf16.mxu0 0
        %1410 = vmatpush1.bf16.msra.mxu0 0
        %1411 = vmatprep.subr.bf16.mxu0 0
        %1412 = vmatpush1.bf16.msra.mxu0 0
        %1413 = vmatprep.subr.bf16.mxu0 0
        %1414 = vmatpush1.bf16.msra.mxu0 0
        %1415 = vmatprep.subr.bf16.mxu0 0
        %1416 = vmatpush1.bf16.msra.mxu0 0
        %1417 = vmatprep.subr.bf16.mxu0 0
        %1418 = vmatpush1.bf16.msra.mxu0 0
        %1419 = vmatprep.subr.bf16.mxu0 0
        %1420 = vmatpush1.bf16.msra.mxu0 0
        %1421 = vmatprep.subr.bf16.mxu0 0
        %1422 = vmatpush1.bf16.msra.mxu0 0
        %1423 = vmatprep.subr.bf16.mxu0 0
        %1424 = vmatpush1.bf16.msra.mxu0 0
        %1425 = vmatprep.mubr.bf16.mxu0 0
        %1426 = vmatmul.mubr.bf16.gmra.mrb[0].mxu0 %v1391
        %v1427 = vpop.f32.mrb[0].mxu0
        %v1428 = vadd.f32 0.0, %v1427
        %v1429 = vpop.f32.mrb[0].mxu0
        %v1430 = vpop.f32.mrb[0].mxu0
        %v1431 = vadd.f32 0.0, %v1430
        %v1432 = vpop.f32.mrb[0].mxu0
        %1433 = vdwg.mxu0
        %1436 = vrot.lane.b32.xlu0 %v1178, 32
        %v1437 = vpop.permute.xlu0 %1436
        %1438 = vrot.lane.b32.xlu0 %v1181, 32
        %v1439 = vpop.permute.xlu0 %1438
        %1444 = vrot.lane.b32.xlu0 %v1303, 64
        %v1445 = vpop.permute.xlu0 %1444
        %1446 = vrot.lane.b32.xlu0 %v1306, 64
        %v1447 = vpop.permute.xlu0 %1446
        %1452 = vrot.lane.b32.xlu0 %v1428, 96
        %v1453 = vpop.permute.xlu0 %1452
        %1454 = vrot.lane.b32.xlu0 %v1431, 96
        %v1455 = vpop.permute.xlu0 %1454
        %v1458 = vsel %vm936, %v1050, %v1437
        %v1459 = vsel %vm936, %v1053, %v1439
        %vm1460 = vcmask 523264
        %v1461 = vsel %vm1460, %v1458, %v1445
        %v1462 = vsel %vm1460, %v1459, %v1447
        %vm1463 = vcmask 785408
        %v1464 = vsel %vm1463, %v1461, %v1453
        %v1465 = vsel %vm1463, %v1462, %v1455
        %v1466 = vpack.c.bf16 %v1465, %v1464
        %v1467 = vld [vmem:[%s479] sm:$0xf]
        %v1468 = vld [vmem:[%s479 + $0x4] sm:$0xf]
        %v1469 = vld [vmem:[%s479 + $0x8] sm:$0xf]
        %v1470 = vld [vmem:[%s479 + $0xc] sm:$0xf]
        %v1471 = vld [vmem:[%s479 + $0x10] sm:$0xf]
        %v1472 = vld [vmem:[%s479 + $0x14] sm:$0xf]
        %v1473 = vld [vmem:[%s479 + $0x18] sm:$0xf]
        %v1474 = vld [vmem:[%s479 + $0x1c] sm:$0xf]
        %v1475 = vld [vmem:[%s479 + $0x20] sm:$0xf]
        %v1476 = vld [vmem:[%s479 + $0x24] sm:$0xf]
        %v1477 = vld [vmem:[%s479 + $0x28] sm:$0xf]
        %v1478 = vld [vmem:[%s479 + $0x2c] sm:$0xf]
        %v1479 = vld [vmem:[%s479 + $0x30] sm:$0xf]
        %v1480 = vld [vmem:[%s479 + $0x34] sm:$0xf]
        %v1481 = vld [vmem:[%s479 + $0x38] sm:$0xf]
        %v1482 = vld [vmem:[%s479 + $0x3c] sm:$0xf]
        %v1499 = vunpack.c.l.b16 %v1467
        %v1500 = vunpack.c.l.b16 %v1468
        %v1501 = vunpack.c.l.b16 %v1469
        %v1502 = vunpack.c.l.b16 %v1470
        %v1503 = vunpack.c.l.b16 %v1471
        %v1504 = vunpack.c.l.b16 %v1472
        %v1505 = vunpack.c.l.b16 %v1473
        %v1506 = vunpack.c.l.b16 %v1474
        %v1507 = vunpack.c.l.b16 %v1475
        %v1508 = vunpack.c.l.b16 %v1476
        %v1509 = vunpack.c.l.b16 %v1477
        %v1510 = vunpack.c.l.b16 %v1478
        %v1511 = vunpack.c.l.b16 %v1479
        %v1512 = vunpack.c.l.b16 %v1480
        %v1513 = vunpack.c.l.b16 %v1481
        %v1514 = vunpack.c.l.b16 %v1482
        %v1515 = vpack.c.b16 %v1500, %v1499
        %v1516 = vpack.c.b16 %v1502, %v1501
        %v1517 = vpack.c.b16 %v1504, %v1503
        %v1518 = vpack.c.b16 %v1506, %v1505
        %v1519 = vpack.c.b16 %v1508, %v1507
        %v1520 = vpack.c.b16 %v1510, %v1509
        %v1521 = vpack.c.b16 %v1512, %v1511
        %v1522 = vpack.c.b16 %v1514, %v1513
        %1531 = vmatprep.subr.bf16.mxu0 0
        %1532 = vmatpush1.bf16.msra.mxu0 %v1515
        %1533 = vmatprep.subr.bf16.mxu0 0
        %1534 = vmatpush1.bf16.msra.mxu0 %v1516
        %1535 = vmatprep.subr.bf16.mxu0 0
        %1536 = vmatpush1.bf16.msra.mxu0 %v1517
        %1537 = vmatprep.subr.bf16.mxu0 0
        %1538 = vmatpush1.bf16.msra.mxu0 %v1518
        %1539 = vmatprep.subr.bf16.mxu0 0
        %1540 = vmatpush1.bf16.msra.mxu0 %v1519
        %1541 = vmatprep.subr.bf16.mxu0 0
        %1542 = vmatpush1.bf16.msra.mxu0 %v1520
        %1543 = vmatprep.subr.bf16.mxu0 0
        %1544 = vmatpush1.bf16.msra.mxu0 %v1521
        %1545 = vmatprep.subr.bf16.mxu0 0
        %1546 = vmatpush1.bf16.msra.mxu0 %v1522
        %1547 = vmatprep.subr.bf16.mxu0 0
        %1548 = vmatpush1.bf16.msra.mxu0 0
        %1549 = vmatprep.subr.bf16.mxu0 0
        %1550 = vmatpush1.bf16.msra.mxu0 0
        %1551 = vmatprep.subr.bf16.mxu0 0
        %1552 = vmatpush1.bf16.msra.mxu0 0
        %1553 = vmatprep.subr.bf16.mxu0 0
        %1554 = vmatpush1.bf16.msra.mxu0 0
        %1555 = vmatprep.subr.bf16.mxu0 0
        %1556 = vmatpush1.bf16.msra.mxu0 0
        %1557 = vmatprep.subr.bf16.mxu0 0
        %1558 = vmatpush1.bf16.msra.mxu0 0
        %1559 = vmatprep.subr.bf16.mxu0 0
        %1560 = vmatpush1.bf16.msra.mxu0 0
        %1561 = vmatprep.subr.bf16.mxu0 0
        %1562 = vmatpush1.bf16.msra.mxu0 0
        %1563 = vmatprep.mubr.bf16.mxu0 0
        %1564 = vmatmul.mubr.bf16.gmra.mrb[0].mxu0 %v1466
        %v1565 = vpop.f32.mrb[0].mxu0
        %v1566 = vadd.f32 0.0, %v1565
        %v1567 = vpop.f32.mrb[0].mxu0
        %v1568 = vpop.f32.mrb[0].mxu0
        %v1569 = vadd.f32 0.0, %v1568
        %v1570 = vpop.f32.mrb[0].mxu0
        %1571 = vdwg.mxu0
        %v1572 = vadd.f32 %v637, %v1566
        %v1573 = vadd.f32 %v638, %v1569
        %v1574 = vlaneseq
        %v1575 = vshrl.u32 %v1574, 7
        %v1576 = vsub.s32 4, %v1575
        %v1577 = vrot.slane %v633, %v1576
        %v1578 = vadd.f32 %v1572, %v1577
        %v1579 = vadd.f32 %v1573, %v1577
        %1580 = vadd.xlane.f32.xlu0 %v1578
        %v1581 = vpop.xlane.xlu0 %1580
        %1582 = vadd.xlane.f32.xlu0 %v1579
        %v1583 = vpop.xlane.xlu0 %1582
        %v1584 = vmul.f32 %v1581, %v643
        %v1585 = vmul.f32 %v1583, %v643
        %v1586 = vsub.f32 %v1578, %v1584
        %v1587 = vsub.f32 %v1579, %v1585
        %v1588 = vmul.f32 %v1586, %v1586
        %v1589 = vmul.f32 %v1587, %v1587
        %1590 = vadd.xlane.f32.xlu0 %v1588
        %v1591 = vpop.xlane.xlu0 %1590
        %1592 = vadd.xlane.f32.xlu0 %v1589
        %v1593 = vpop.xlane.xlu0 %1592
        %v1594 = vmul.f32 %v1591, %v643
        %v1595 = vmul.f32 %v1593, %v643
        %v1596 = vadd.f32 %v1594, 1e-05
        %v1597 = vadd.f32 %v1595, 1e-05
        %v1598 = vrsqrt.pop %v1596
        %v1599 = vrsqrt.pop %v1597
        %v1600 = vmul.f32 %v1586, %v1598
        %v1601 = vmul.f32 %v1587, %v1599
        %v1602 = vlaneseq
        %v1603 = vshrl.u32 %v1602, 7
        %v1604 = vsub.s32 2, %v1603
        %v1605 = vrot.slane %v633, %v1604
        %v1606 = vmul.f32 %v1600, %v1605
        %v1607 = vmul.f32 %v1601, %v1605
        %v1608 = vlaneseq
        %v1609 = vshrl.u32 %v1608, 7
        %v1610 = vsub.s32 3, %v1609
        %v1611 = vrot.slane %v633, %v1610
        %v1612 = vadd.f32 %v1606, %v1611
        %v1613 = vadd.f32 %v1607, %v1611
        %v1614 = vpack.c.bf16 %v1613, %v1612
        %v1615 = vld [vmem:[%s488] sm:$0xff]
        %v1616 = vld [vmem:[%s488 + $0x8] sm:$0xff]
        %v1617 = vld [vmem:[%s488 + $0x10] sm:$0xff]
        %v1618 = vld [vmem:[%s488 + $0x18] sm:$0xff]
        %v1619 = vld [vmem:[%s488 + $0x20] sm:$0xff]
        %v1620 = vld [vmem:[%s488 + $0x28] sm:$0xff]
        %v1621 = vld [vmem:[%s488 + $0x30] sm:$0xff]
        %v1622 = vld [vmem:[%s488 + $0x38] sm:$0xff]
        %v1623 = vld [vmem:[%s488 + $0x40] sm:$0xff]
        %v1624 = vld [vmem:[%s488 + $0x48] sm:$0xff]
        %v1625 = vld [vmem:[%s488 + $0x50] sm:$0xff]
        %v1626 = vld [vmem:[%s488 + $0x58] sm:$0xff]
        %v1627 = vld [vmem:[%s488 + $0x60] sm:$0xff]
        %v1628 = vld [vmem:[%s488 + $0x68] sm:$0xff]
        %v1629 = vld [vmem:[%s488 + $0x70] sm:$0xff]
        %v1630 = vld [vmem:[%s488 + $0x78] sm:$0xff]
        %v1631 = vld [vmem:[%s488 + $0x80] sm:$0xff]
        %v1632 = vld [vmem:[%s488 + $0x88] sm:$0xff]
        %v1633 = vld [vmem:[%s488 + $0x90] sm:$0xff]
        %v1634 = vld [vmem:[%s488 + $0x98] sm:$0xff]
        %v1635 = vld [vmem:[%s488 + $0xa0] sm:$0xff]
        %v1636 = vld [vmem:[%s488 + $0xa8] sm:$0xff]
        %v1637 = vld [vmem:[%s488 + $0xb0] sm:$0xff]
        %v1638 = vld [vmem:[%s488 + $0xb8] sm:$0xff]
        %v1639 = vld [vmem:[%s488 + $0xc0] sm:$0xff]
        %v1640 = vld [vmem:[%s488 + $0xc8] sm:$0xff]
        %v1641 = vld [vmem:[%s488 + $0xd0] sm:$0xff]
        %v1642 = vld [vmem:[%s488 + $0xd8] sm:$0xff]
        %v1643 = vld [vmem:[%s488 + $0xe0] sm:$0xff]
        %v1644 = vld [vmem:[%s488 + $0xe8] sm:$0xff]
        %v1645 = vld [vmem:[%s488 + $0xf0] sm:$0xff]
        %v1646 = vld [vmem:[%s488 + $0xf8] sm:$0xff]
        %v1647 = vlaneseq
        %v1648 = vshrl.u32 %v1647, 7
        %v1649 = vsub.s32 7, %v1648
        %v1650 = vrot.slane %v633, %v1649
        %v1651 = vlaneseq
        %v1652 = vshrl.u32 %v1651, 7
        %v1653 = vsub.s32 7, %v1652
        %v1654 = vrot.slane %v634, %v1653
        %v1655 = vlaneseq
        %v1656 = vshrl.u32 %v1655, 7
        %v1657 = vsub.s32 7, %v1656
        %v1658 = vrot.slane %v635, %v1657
        %v1659 = vlaneseq
        %v1660 = vshrl.u32 %v1659, 7
        %v1661 = vsub.s32 7, %v1660
        %v1662 = vrot.slane %v636, %v1661
        %v1695 = vunpack.c.l.b16 %v1615
        %v1696 = vunpack.c.h.b16 %v1615
        %v1697 = vunpack.c.l.b16 %v1616
        %v1698 = vunpack.c.h.b16 %v1616
        %v1699 = vunpack.c.l.b16 %v1617
        %v1700 = vunpack.c.h.b16 %v1617
        %v1701 = vunpack.c.l.b16 %v1618
        %v1702 = vunpack.c.h.b16 %v1618
        %v1703 = vunpack.c.l.b16 %v1619
        %v1704 = vunpack.c.h.b16 %v1619
        %v1705 = vunpack.c.l.b16 %v1620
        %v1706 = vunpack.c.h.b16 %v1620
        %v1707 = vunpack.c.l.b16 %v1621
        %v1708 = vunpack.c.h.b16 %v1621
        %v1709 = vunpack.c.l.b16 %v1622
        %v1710 = vunpack.c.h.b16 %v1622
        %v1711 = vunpack.c.l.b16 %v1623
        %v1712 = vunpack.c.h.b16 %v1623
        %v1713 = vunpack.c.l.b16 %v1624
        %v1714 = vunpack.c.h.b16 %v1624
        %v1715 = vunpack.c.l.b16 %v1625
        %v1716 = vunpack.c.h.b16 %v1625
        %v1717 = vunpack.c.l.b16 %v1626
        %v1718 = vunpack.c.h.b16 %v1626
        %v1719 = vunpack.c.l.b16 %v1627
        %v1720 = vunpack.c.h.b16 %v1627
        %v1721 = vunpack.c.l.b16 %v1628
        %v1722 = vunpack.c.h.b16 %v1628
        %v1723 = vunpack.c.l.b16 %v1629
        %v1724 = vunpack.c.h.b16 %v1629
        %v1725 = vunpack.c.l.b16 %v1630
        %v1726 = vunpack.c.h.b16 %v1630
        %v1727 = vunpack.c.l.b16 %v1631
        %v1728 = vunpack.c.h.b16 %v1631
        %v1729 = vunpack.c.l.b16 %v1632
        %v1730 = vunpack.c.h.b16 %v1632
        %v1731 = vunpack.c.l.b16 %v1633
        %v1732 = vunpack.c.h.b16 %v1633
        %v1733 = vunpack.c.l.b16 %v1634
        %v1734 = vunpack.c.h.b16 %v1634
        %v1735 = vunpack.c.l.b16 %v1635
        %v1736 = vunpack.c.h.b16 %v1635
        %v1737 = vunpack.c.l.b16 %v1636
        %v1738 = vunpack.c.h.b16 %v1636
        %v1739 = vunpack.c.l.b16 %v1637
        %v1740 = vunpack.c.h.b16 %v1637
        %v1741 = vunpack.c.l.b16 %v1638
        %v1742 = vunpack.c.h.b16 %v1638
        %v1743 = vunpack.c.l.b16 %v1639
        %v1744 = vunpack.c.h.b16 %v1639
        %v1745 = vunpack.c.l.b16 %v1640
        %v1746 = vunpack.c.h.b16 %v1640
        %v1747 = vunpack.c.l.b16 %v1641
        %v1748 = vunpack.c.h.b16 %v1641
        %v1749 = vunpack.c.l.b16 %v1642
        %v1750 = vunpack.c.h.b16 %v1642
        %v1751 = vunpack.c.l.b16 %v1643
        %v1752 = vunpack.c.h.b16 %v1643
        %v1753 = vunpack.c.l.b16 %v1644
        %v1754 = vunpack.c.h.b16 %v1644
        %v1755 = vunpack.c.l.b16 %v1645
        %v1756 = vunpack.c.h.b16 %v1645
        %v1757 = vunpack.c.l.b16 %v1646
        %v1758 = vunpack.c.h.b16 %v1646
        %v1759 = vpack.c.b16 %v1699, %v1695
        %v1760 = vpack.c.b16 %v1700, %v1696
        %v1761 = vpack.c.b16 %v1701, %v1697
        %v1762 = vpack.c.b16 %v1702, %v1698
        %v1763 = vpack.c.b16 %v1707, %v1703
        %v1764 = vpack.c.b16 %v1708, %v1704
        %v1765 = vpack.c.b16 %v1709, %v1705
        %v1766 = vpack.c.b16 %v1710, %v1706
        %v1767 = vpack.c.b16 %v1715, %v1711
        %v1768 = vpack.c.b16 %v1716, %v1712
        %v1769 = vpack.c.b16 %v1717, %v1713
        %v1770 = vpack.c.b16 %v1718, %v1714
        %v1771 = vpack.c.b16 %v1723, %v1719
        %v1772 = vpack.c.b16 %v1724, %v1720
        %v1773 = vpack.c.b16 %v1725, %v1721
        %v1774 = vpack.c.b16 %v1726, %v1722
        %v1775 = vpack.c.b16 %v1731, %v1727
        %v1776 = vpack.c.b16 %v1732, %v1728
        %v1777 = vpack.c.b16 %v1733, %v1729
        %v1778 = vpack.c.b16 %v1734, %v1730
        %v1779 = vpack.c.b16 %v1739, %v1735
        %v1780 = vpack.c.b16 %v1740, %v1736
        %v1781 = vpack.c.b16 %v1741, %v1737
        %v1782 = vpack.c.b16 %v1742, %v1738
        %v1783 = vpack.c.b16 %v1747, %v1743
        %v1784 = vpack.c.b16 %v1748, %v1744
        %v1785 = vpack.c.b16 %v1749, %v1745
        %v1786 = vpack.c.b16 %v1750, %v1746
        %v1787 = vpack.c.b16 %v1755, %v1751
        %v1788 = vpack.c.b16 %v1756, %v1752
        %v1789 = vpack.c.b16 %v1757, %v1753
        %v1790 = vpack.c.b16 %v1758, %v1754
        %1823 = vmatprep.subr.bf16.mxu0 %v1760
        %1824 = vmatpush1.bf16.msra.mxu0 %v1759
        %1825 = vmatprep.subr.bf16.mxu0 %v1764
        %1826 = vmatpush1.bf16.msra.mxu0 %v1763
        %1827 = vmatprep.subr.bf16.mxu0 %v1768
        %1828 = vmatpush1.bf16.msra.mxu0 %v1767
        %1829 = vmatprep.subr.bf16.mxu0 %v1772
        %1830 = vmatpush1.bf16.msra.mxu0 %v1771
        %1831 = vmatprep.subr.bf16.mxu0 %v1776
        %1832 = vmatpush1.bf16.msra.mxu0 %v1775
        %1833 = vmatprep.subr.bf16.mxu0 %v1780
        %1834 = vmatpush1.bf16.msra.mxu0 %v1779
        %1835 = vmatprep.subr.bf16.mxu0 %v1784
        %1836 = vmatpush1.bf16.msra.mxu0 %v1783
        %1837 = vmatprep.subr.bf16.mxu0 %v1788
        %1838 = vmatpush1.bf16.msra.mxu0 %v1787
        %1839 = vmatprep.subr.bf16.mxu0 0
        %1840 = vmatpush1.bf16.msra.mxu0 0
        %1841 = vmatprep.subr.bf16.mxu0 0
        %1842 = vmatpush1.bf16.msra.mxu0 0
        %1843 = vmatprep.subr.bf16.mxu0 0
        %1844 = vmatpush1.bf16.msra.mxu0 0
        %1845 = vmatprep.subr.bf16.mxu0 0
        %1846 = vmatpush1.bf16.msra.mxu0 0
        %1847 = vmatprep.subr.bf16.mxu0 0
        %1848 = vmatpush1.bf16.msra.mxu0 0
        %1849 = vmatprep.subr.bf16.mxu0 0
        %1850 = vmatpush1.bf16.msra.mxu0 0
        %1851 = vmatprep.subr.bf16.mxu0 0
        %1852 = vmatpush1.bf16.msra.mxu0 0
        %1853 = vmatprep.subr.bf16.mxu0 0
        %1854 = vmatpush1.bf16.msra.mxu0 0
        %1855 = vmatprep.mubr.bf16.mxu0 0
        %1856 = vmatmul.mubr.bf16.gmra.mrb[0].mxu0 %v1614
        %v1857 = vpop.f32.mrb[0].mxu0
        %v1858 = vadd.f32 %v1650, %v1857
        %v1859 = vpop.f32.mrb[0].mxu0
        %v1860 = vadd.f32 %v1654, %v1859
        %v1861 = vpop.f32.mrb[0].mxu0
        %v1862 = vadd.f32 %v1650, %v1861
        %v1863 = vpop.f32.mrb[0].mxu0
        %v1864 = vadd.f32 %v1654, %v1863
        %1865 = vdwg.mxu0
        %1866 = vmatprep.subr.bf16.mxu0 %v1762
        %1867 = vmatpush1.bf16.msra.mxu0 %v1761
        %1868 = vmatprep.subr.bf16.mxu0 %v1766
        %1869 = vmatpush1.bf16.msra.mxu0 %v1765
        %1870 = vmatprep.subr.bf16.mxu0 %v1770
        %1871 = vmatpush1.bf16.msra.mxu0 %v1769
        %1872 = vmatprep.subr.bf16.mxu0 %v1774
        %1873 = vmatpush1.bf16.msra.mxu0 %v1773
        %1874 = vmatprep.subr.bf16.mxu0 %v1778
        %1875 = vmatpush1.bf16.msra.mxu0 %v1777
        %1876 = vmatprep.subr.bf16.mxu0 %v1782
        %1877 = vmatpush1.bf16.msra.mxu0 %v1781
        %1878 = vmatprep.subr.bf16.mxu0 %v1786
        %1879 = vmatpush1.bf16.msra.mxu0 %v1785
        %1880 = vmatprep.subr.bf16.mxu0 %v1790
        %1881 = vmatpush1.bf16.msra.mxu0 %v1789
        %1882 = vmatprep.subr.bf16.mxu0 0
        %1883 = vmatpush1.bf16.msra.mxu0 0
        %1884 = vmatprep.subr.bf16.mxu0 0
        %1885 = vmatpush1.bf16.msra.mxu0 0
        %1886 = vmatprep.subr.bf16.mxu0 0
        %1887 = vmatpush1.bf16.msra.mxu0 0
        %1888 = vmatprep.subr.bf16.mxu0 0
        %1889 = vmatpush1.bf16.msra.mxu0 0
        %1890 = vmatprep.subr.bf16.mxu0 0
        %1891 = vmatpush1.bf16.msra.mxu0 0
        %1892 = vmatprep.subr.bf16.mxu0 0
        %1893 = vmatpush1.bf16.msra.mxu0 0
        %1894 = vmatprep.subr.bf16.mxu0 0
        %1895 = vmatpush1.bf16.msra.mxu0 0
        %1896 = vmatprep.subr.bf16.mxu0 0
        %1897 = vmatpush1.bf16.msra.mxu0 0
        %1898 = vmatprep.mubr.bf16.mxu0 0
        %1899 = vmatmul.mubr.bf16.gmra.mrb[0].mxu0 %v1614
        %v1900 = vpop.f32.mrb[0].mxu0
        %v1901 = vadd.f32 %v1658, %v1900
        %v1902 = vpop.f32.mrb[0].mxu0
        %v1903 = vadd.f32 %v1662, %v1902
        %v1904 = vpop.f32.mrb[0].mxu0
        %v1905 = vadd.f32 %v1658, %v1904
        %v1906 = vpop.f32.mrb[0].mxu0
        %v1907 = vadd.f32 %v1662, %v1906
        %1908 = vdwg.mxu0
        %v1909 = vmul.f32 %v1858, 0.5
        %v1910 = vmul.f32 %v1860, 0.5
        %v1911 = vmul.f32 %v1901, 0.5
        %v1912 = vmul.f32 %v1903, 0.5
        %v1913 = vmul.f32 %v1862, 0.5
        %v1914 = vmul.f32 %v1864, 0.5
        %v1915 = vmul.f32 %v1905, 0.5
        %v1916 = vmul.f32 %v1907, 0.5
        %v1917 = vmul.f32 %v1858, 0.044715
        %v1918 = vmul.f32 %v1860, 0.044715
        %v1919 = vmul.f32 %v1901, 0.044715
        %v1920 = vmul.f32 %v1903, 0.044715
        %v1921 = vmul.f32 %v1862, 0.044715
        %v1922 = vmul.f32 %v1864, 0.044715
        %v1923 = vmul.f32 %v1905, 0.044715
        %v1924 = vmul.f32 %v1907, 0.044715
        %v1925 = vmul.f32 %v1917, %v1858
        %v1926 = vmul.f32 %v1918, %v1860
        %v1927 = vmul.f32 %v1919, %v1901
        %v1928 = vmul.f32 %v1920, %v1903
        %v1929 = vmul.f32 %v1921, %v1862
        %v1930 = vmul.f32 %v1922, %v1864
        %v1931 = vmul.f32 %v1923, %v1905
        %v1932 = vmul.f32 %v1924, %v1907
        %v1933 = vmul.f32 %v1925, %v1858
        %v1934 = vmul.f32 %v1926, %v1860
        %v1935 = vmul.f32 %v1927, %v1901
        %v1936 = vmul.f32 %v1928, %v1903
        %v1937 = vmul.f32 %v1929, %v1862
        %v1938 = vmul.f32 %v1930, %v1864
        %v1939 = vmul.f32 %v1931, %v1905
        %v1940 = vmul.f32 %v1932, %v1907
        %v1941 = vadd.f32 %v1858, %v1933
        %v1942 = vadd.f32 %v1860, %v1934
        %v1943 = vadd.f32 %v1901, %v1935
        %v1944 = vadd.f32 %v1903, %v1936
        %v1945 = vadd.f32 %v1862, %v1937
        %v1946 = vadd.f32 %v1864, %v1938
        %v1947 = vadd.f32 %v1905, %v1939
        %v1948 = vadd.f32 %v1907, %v1940
        %v1949 = vmul.f32 %v1941, 0.7978846
        %v1950 = vmul.f32 %v1942, 0.7978846
        %v1951 = vmul.f32 %v1943, 0.7978846
        %v1952 = vmul.f32 %v1944, 0.7978846
        %v1953 = vmul.f32 %v1945, 0.7978846
        %v1954 = vmul.f32 %v1946, 0.7978846
        %v1955 = vmul.f32 %v1947, 0.7978846
        %v1956 = vmul.f32 %v1948, 0.7978846
        %v1957 = vtanh.pop %v1949
        %v1958 = vtanh.pop %v1950
        %v1959 = vtanh.pop %v1951
        %v1960 = vtanh.pop %v1952
        %v1961 = vtanh.pop %v1953
        %v1962 = vtanh.pop %v1954
        %v1963 = vtanh.pop %v1955
        %v1964 = vtanh.pop %v1956
        %v1965 = vadd.f32 %v1957, 1.0
        %v1966 = vadd.f32 %v1958, 1.0
        %v1967 = vadd.f32 %v1959, 1.0
        %v1968 = vadd.f32 %v1960, 1.0
        %v1969 = vadd.f32 %v1961, 1.0
        %v1970 = vadd.f32 %v1962, 1.0
        %v1971 = vadd.f32 %v1963, 1.0
        %v1972 = vadd.f32 %v1964, 1.0
        %v1973 = vmul.f32 %v1909, %v1965
        %v1974 = vmul.f32 %v1910, %v1966
        %v1975 = vmul.f32 %v1911, %v1967
        %v1976 = vmul.f32 %v1912, %v1968
        %v1977 = vmul.f32 %v1913, %v1969
        %v1978 = vmul.f32 %v1914, %v1970
        %v1979 = vmul.f32 %v1915, %v1971
        %v1980 = vmul.f32 %v1916, %v1972
        %v1981 = vpack.c.bf16 %v1977, %v1973
        %v1982 = vpack.c.bf16 %v1978, %v1974
        %v1983 = vpack.c.bf16 %v1979, %v1975
        %v1984 = vpack.c.bf16 %v1980, %v1976
        %v1985 = vld [vmem:[%s497] sm:$0xf]
        %v1986 = vld [vmem:[%s497 + $0x4] sm:$0xf]
        %v1987 = vld [vmem:[%s497 + $0x8] sm:$0xf]
        %v1988 = vld [vmem:[%s497 + $0xc] sm:$0xf]
        %v1989 = vld [vmem:[%s497 + $0x10] sm:$0xf]
        %v1990 = vld [vmem:[%s497 + $0x14] sm:$0xf]
        %v1991 = vld [vmem:[%s497 + $0x18] sm:$0xf]
        %v1992 = vld [vmem:[%s497 + $0x1c] sm:$0xf]
        %v1993 = vld [vmem:[%s497 + $0x20] sm:$0xf]
        %v1994 = vld [vmem:[%s497 + $0x24] sm:$0xf]
        %v1995 = vld [vmem:[%s497 + $0x28] sm:$0xf]
        %v1996 = vld [vmem:[%s497 + $0x2c] sm:$0xf]
        %v1997 = vld [vmem:[%s497 + $0x30] sm:$0xf]
        %v1998 = vld [vmem:[%s497 + $0x34] sm:$0xf]
        %v1999 = vld [vmem:[%s497 + $0x38] sm:$0xf]
        %v2000 = vld [vmem:[%s497 + $0x3c] sm:$0xf]
        %v2001 = vld [vmem:[%s497 + $0x40] sm:$0xf]
        %v2002 = vld [vmem:[%s497 + $0x44] sm:$0xf]
        %v2003 = vld [vmem:[%s497 + $0x48] sm:$0xf]
        %v2004 = vld [vmem:[%s497 + $0x4c] sm:$0xf]
        %v2005 = vld [vmem:[%s497 + $0x50] sm:$0xf]
        %v2006 = vld [vmem:[%s497 + $0x54] sm:$0xf]
        %v2007 = vld [vmem:[%s497 + $0x58] sm:$0xf]
        %v2008 = vld [vmem:[%s497 + $0x5c] sm:$0xf]
        %v2009 = vld [vmem:[%s497 + $0x60] sm:$0xf]
        %v2010 = vld [vmem:[%s497 + $0x64] sm:$0xf]
        %v2011 = vld [vmem:[%s497 + $0x68] sm:$0xf]
        %v2012 = vld [vmem:[%s497 + $0x6c] sm:$0xf]
        %v2013 = vld [vmem:[%s497 + $0x70] sm:$0xf]
        %v2014 = vld [vmem:[%s497 + $0x74] sm:$0xf]
        %v2015 = vld [vmem:[%s497 + $0x78] sm:$0xf]
        %v2016 = vld [vmem:[%s497 + $0x7c] sm:$0xf]
        %v2017 = vld [vmem:[%s497 + $0x80] sm:$0xf]
        %v2018 = vld [vmem:[%s497 + $0x84] sm:$0xf]
        %v2019 = vld [vmem:[%s497 + $0x88] sm:$0xf]
        %v2020 = vld [vmem:[%s497 + $0x8c] sm:$0xf]
        %v2021 = vld [vmem:[%s497 + $0x90] sm:$0xf]
        %v2022 = vld [vmem:[%s497 + $0x94] sm:$0xf]
        %v2023 = vld [vmem:[%s497 + $0x98] sm:$0xf]
        %v2024 = vld [vmem:[%s497 + $0x9c] sm:$0xf]
        %v2025 = vld [vmem:[%s497 + $0xa0] sm:$0xf]
        %v2026 = vld [vmem:[%s497 + $0xa4] sm:$0xf]
        %v2027 = vld [vmem:[%s497 + $0xa8] sm:$0xf]
        %v2028 = vld [vmem:[%s497 + $0xac] sm:$0xf]
        %v2029 = vld [vmem:[%s497 + $0xb0] sm:$0xf]
        %v2030 = vld [vmem:[%s497 + $0xb4] sm:$0xf]
        %v2031 = vld [vmem:[%s497 + $0xb8] sm:$0xf]
        %v2032 = vld [vmem:[%s497 + $0xbc] sm:$0xf]
        %v2033 = vld [vmem:[%s497 + $0xc0] sm:$0xf]
        %v2034 = vld [vmem:[%s497 + $0xc4] sm:$0xf]
        %v2035 = vld [vmem:[%s497 + $0xc8] sm:$0xf]
        %v2036 = vld [vmem:[%s497 + $0xcc] sm:$0xf]
        %v2037 = vld [vmem:[%s497 + $0xd0] sm:$0xf]
        %v2038 = vld [vmem:[%s497 + $0xd4] sm:$0xf]
        %v2039 = vld [vmem:[%s497 + $0xd8] sm:$0xf]
        %v2040 = vld [vmem:[%s497 + $0xdc] sm:$0xf]
        %v2041 = vld [vmem:[%s497 + $0xe0] sm:$0xf]
        %v2042 = vld [vmem:[%s497 + $0xe4] sm:$0xf]
        %v2043 = vld [vmem:[%s497 + $0xe8] sm:$0xf]
        %v2044 = vld [vmem:[%s497 + $0xec] sm:$0xf]
        %v2045 = vld [vmem:[%s497 + $0xf0] sm:$0xf]
        %v2046 = vld [vmem:[%s497 + $0xf4] sm:$0xf]
        %v2047 = vld [vmem:[%s497 + $0xf8] sm:$0xf]
        %v2048 = vld [vmem:[%s497 + $0xfc] sm:$0xf]
        %v2113 = vunpack.c.l.b16 %v1985
        %v2114 = vunpack.c.l.b16 %v1986
        %v2115 = vunpack.c.l.b16 %v1987
        %v2116 = vunpack.c.l.b16 %v1988
        %v2117 = vunpack.c.l.b16 %v1989
        %v2118 = vunpack.c.l.b16 %v1990
        %v2119 = vunpack.c.l.b16 %v1991
        %v2120 = vunpack.c.l.b16 %v1992
        %v2121 = vunpack.c.l.b16 %v1993
        %v2122 = vunpack.c.l.b16 %v1994
        %v2123 = vunpack.c.l.b16 %v1995
        %v2124 = vunpack.c.l.b16 %v1996
        %v2125 = vunpack.c.l.b16 %v1997
        %v2126 = vunpack.c.l.b16 %v1998
        %v2127 = vunpack.c.l.b16 %v1999
        %v2128 = vunpack.c.l.b16 %v2000
        %v2129 = vunpack.c.l.b16 %v2001
        %v2130 = vunpack.c.l.b16 %v2002
        %v2131 = vunpack.c.l.b16 %v2003
        %v2132 = vunpack.c.l.b16 %v2004
        %v2133 = vunpack.c.l.b16 %v2005
        %v2134 = vunpack.c.l.b16 %v2006
        %v2135 = vunpack.c.l.b16 %v2007
        %v2136 = vunpack.c.l.b16 %v2008
        %v2137 = vunpack.c.l.b16 %v2009
        %v2138 = vunpack.c.l.b16 %v2010
        %v2139 = vunpack.c.l.b16 %v2011
        %v2140 = vunpack.c.l.b16 %v2012
        %v2141 = vunpack.c.l.b16 %v2013
        %v2142 = vunpack.c.l.b16 %v2014
        %v2143 = vunpack.c.l.b16 %v2015
        %v2144 = vunpack.c.l.b16 %v2016
        %v2145 = vunpack.c.l.b16 %v2017
        %v2146 = vunpack.c.l.b16 %v2018
        %v2147 = vunpack.c.l.b16 %v2019
        %v2148 = vunpack.c.l.b16 %v2020
        %v2149 = vunpack.c.l.b16 %v2021
        %v2150 = vunpack.c.l.b16 %v2022
        %v2151 = vunpack.c.l.b16 %v2023
        %v2152 = vunpack.c.l.b16 %v2024
        %v2153 = vunpack.c.l.b16 %v2025
        %v2154 = vunpack.c.l.b16 %v2026
        %v2155 = vunpack.c.l.b16 %v2027
        %v2156 = vunpack.c.l.b16 %v2028
        %v2157 = vunpack.c.l.b16 %v2029
        %v2158 = vunpack.c.l.b16 %v2030
        %v2159 = vunpack.c.l.b16 %v2031
        %v2160 = vunpack.c.l.b16 %v2032
        %v2161 = vunpack.c.l.b16 %v2033
        %v2162 = vunpack.c.l.b16 %v2034
        %v2163 = vunpack.c.l.b16 %v2035
        %v2164 = vunpack.c.l.b16 %v2036
        %v2165 = vunpack.c.l.b16 %v2037
        %v2166 = vunpack.c.l.b16 %v2038
        %v2167 = vunpack.c.l.b16 %v2039
        %v2168 = vunpack.c.l.b16 %v2040
        %v2169 = vunpack.c.l.b16 %v2041
        %v2170 = vunpack.c.l.b16 %v2042
        %v2171 = vunpack.c.l.b16 %v2043
        %v2172 = vunpack.c.l.b16 %v2044
        %v2173 = vunpack.c.l.b16 %v2045
        %v2174 = vunpack.c.l.b16 %v2046
        %v2175 = vunpack.c.l.b16 %v2047
        %v2176 = vunpack.c.l.b16 %v2048
        %v2177 = vpack.c.b16 %v2114, %v2113
        %v2178 = vpack.c.b16 %v2116, %v2115
        %v2179 = vpack.c.b16 %v2118, %v2117
        %v2180 = vpack.c.b16 %v2120, %v2119
        %v2181 = vpack.c.b16 %v2122, %v2121
        %v2182 = vpack.c.b16 %v2124, %v2123
        %v2183 = vpack.c.b16 %v2126, %v2125
        %v2184 = vpack.c.b16 %v2128, %v2127
        %v2185 = vpack.c.b16 %v2130, %v2129
        %v2186 = vpack.c.b16 %v2132, %v2131
        %v2187 = vpack.c.b16 %v2134, %v2133
        %v2188 = vpack.c.b16 %v2136, %v2135
        %v2189 = vpack.c.b16 %v2138, %v2137
        %v2190 = vpack.c.b16 %v2140, %v2139
        %v2191 = vpack.c.b16 %v2142, %v2141
        %v2192 = vpack.c.b16 %v2144, %v2143
        %v2193 = vpack.c.b16 %v2146, %v2145
        %v2194 = vpack.c.b16 %v2148, %v2147
        %v2195 = vpack.c.b16 %v2150, %v2149
        %v2196 = vpack.c.b16 %v2152, %v2151
        %v2197 = vpack.c.b16 %v2154, %v2153
        %v2198 = vpack.c.b16 %v2156, %v2155
        %v2199 = vpack.c.b16 %v2158, %v2157
        %v2200 = vpack.c.b16 %v2160, %v2159
        %v2201 = vpack.c.b16 %v2162, %v2161
        %v2202 = vpack.c.b16 %v2164, %v2163
        %v2203 = vpack.c.b16 %v2166, %v2165
        %v2204 = vpack.c.b16 %v2168, %v2167
        %v2205 = vpack.c.b16 %v2170, %v2169
        %v2206 = vpack.c.b16 %v2172, %v2171
        %v2207 = vpack.c.b16 %v2174, %v2173
        %v2208 = vpack.c.b16 %v2176, %v2175
        %2241 = vmatprep.subr.bf16.mxu0 0
        %2242 = vmatpush1.bf16.msra.mxu0 %v2177
        %2243 = vmatprep.subr.bf16.mxu0 0
        %2244 = vmatpush1.bf16.msra.mxu0 %v2178
        %2245 = vmatprep.subr.bf16.mxu0 0
        %2246 = vmatpush1.bf16.msra.mxu0 %v2179
        %2247 = vmatprep.subr.bf16.mxu0 0
        %2248 = vmatpush1.bf16.msra.mxu0 %v2180
        %2249 = vmatprep.subr.bf16.mxu0 0
        %2250 = vmatpush1.bf16.msra.mxu0 %v2181
        %2251 = vmatprep.subr.bf16.mxu0 0
        %2252 = vmatpush1.bf16.msra.mxu0 %v2182
        %2253 = vmatprep.subr.bf16.mxu0 0
        %2254 = vmatpush1.bf16.msra.mxu0 %v2183
        %2255 = vmatprep.subr.bf16.mxu0 0
        %2256 = vmatpush1.bf16.msra.mxu0 %v2184
        %2257 = vmatprep.subr.bf16.mxu0 0
        %2258 = vmatpush1.bf16.msra.mxu0 %v2185
        %2259 = vmatprep.subr.bf16.mxu0 0
        %2260 = vmatpush1.bf16.msra.mxu0 %v2186
        %2261 = vmatprep.subr.bf16.mxu0 0
        %2262 = vmatpush1.bf16.msra.mxu0 %v2187
        %2263 = vmatprep.subr.bf16.mxu0 0
        %2264 = vmatpush1.bf16.msra.mxu0 %v2188
        %2265 = vmatprep.subr.bf16.mxu0 0
        %2266 = vmatpush1.bf16.msra.mxu0 %v2189
        %2267 = vmatprep.subr.bf16.mxu0 0
        %2268 = vmatpush1.bf16.msra.mxu0 %v2190
        %2269 = vmatprep.subr.bf16.mxu0 0
        %2270 = vmatpush1.bf16.msra.mxu0 %v2191
        %2271 = vmatprep.subr.bf16.mxu0 0
        %2272 = vmatpush1.bf16.msra.mxu0 %v2192
        %2273 = vmatprep.mubr.bf16.mxu0 %v1982
        %2274 = vmatmul.mubr.bf16.gmra.mrb[0].mxu0 %v1981
        %v2275 = vpop.f32.mrb[0].mxu0
        %v2276 = vadd.f32 0.0, %v2275
        %v2277 = vpop.f32.mrb[0].mxu0
        %v2278 = vpop.f32.mrb[0].mxu0
        %v2279 = vadd.f32 0.0, %v2278
        %v2280 = vpop.f32.mrb[0].mxu0
        %2281 = vdwg.mxu0
        %2282 = vmatprep.subr.bf16.mxu0 0
        %2283 = vmatpush1.bf16.msra.mxu0 %v2193
        %2284 = vmatprep.subr.bf16.mxu0 0
        %2285 = vmatpush1.bf16.msra.mxu0 %v2194
        %2286 = vmatprep.subr.bf16.mxu0 0
        %2287 = vmatpush1.bf16.msra.mxu0 %v2195
        %2288 = vmatprep.subr.bf16.mxu0 0
        %2289 = vmatpush1.bf16.msra.mxu0 %v2196
        %2290 = vmatprep.subr.bf16.mxu0 0
        %2291 = vmatpush1.bf16.msra.mxu0 %v2197
        %2292 = vmatprep.subr.bf16.mxu0 0
        %2293 = vmatpush1.bf16.msra.mxu0 %v2198
        %2294 = vmatprep.subr.bf16.mxu0 0
        %2295 = vmatpush1.bf16.msra.mxu0 %v2199
        %2296 = vmatprep.subr.bf16.mxu0 0
        %2297 = vmatpush1.bf16.msra.mxu0 %v2200
        %2298 = vmatprep.subr.bf16.mxu0 0
        %2299 = vmatpush1.bf16.msra.mxu0 %v2201
        %2300 = vmatprep.subr.bf16.mxu0 0
        %2301 = vmatpush1.bf16.msra.mxu0 %v2202
        %2302 = vmatprep.subr.bf16.mxu0 0
        %2303 = vmatpush1.bf16.msra.mxu0 %v2203
        %2304 = vmatprep.subr.bf16.mxu0 0
        %2305 = vmatpush1.bf16.msra.mxu0 %v2204
        %2306 = vmatprep.subr.bf16.mxu0 0
        %2307 = vmatpush1.bf16.msra.mxu0 %v2205
        %2308 = vmatprep.subr.bf16.mxu0 0
        %2309 = vmatpush1.bf16.msra.mxu0 %v2206
        %2310 = vmatprep.subr.bf16.mxu0 0
        %2311 = vmatpush1.bf16.msra.mxu0 %v2207
        %2312 = vmatprep.subr.bf16.mxu0 0
        %2313 = vmatpush1.bf16.msra.mxu0 %v2208
        %2314 = vmatprep.mubr.bf16.mxu0 %v1984
        %2315 = vmatmul.mubr.bf16.gmra.mrb[0].mxu0 %v1983
        %v2316 = vpop.f32.mrb[0].mxu0
        %v2317 = vadd.f32 %v2276, %v2316
        %v2318 = vpop.f32.mrb[0].mxu0
        %v2319 = vpop.f32.mrb[0].mxu0
        %v2320 = vadd.f32 %v2279, %v2319
        %v2321 = vpop.f32.mrb[0].mxu0
        %2322 = vdwg.mxu0
        %v2323 = vadd.f32 %v1578, %v2317
        %v2324 = vadd.f32 %v1579, %v2320
        %v2325 = vlaneseq
        %v2326 = vshrl.u32 %v2325, 7
        %v2327 = vsub.s32 5, %v2326
        %v2328 = vrot.slane %v633, %v2327
        %v2329 = vadd.f32 %v2323, %v2328
        %v2330 = vadd.f32 %v2324, %v2328
        %2331 = vst [vmem:[#allocation2] sm:$0xff] %v2329
        %2332 = vst [vmem:[#allocation2 + $0x8] sm:$0xff] %v2330
        %p2333 = scmp.eq.s32.totalorder %s31, 1
        // Predicated region
        $region89: #{tpu_custom_call.1} parent=59 // pred_check
          %p2334 = pneg %p2333
        $region90: #{tpu_custom_call.1} parent=59 // pred_check_branch
          %2336 = sbr.rel (%p2334) target = $region92
        $region91: #{tpu_custom_call.1} parent=59 // pred_region
          %v2337 = vld [vmem:[%s9] sm:$0x1]
          %v2338 = vld [vmem:[%s9 + $0x1] sm:$0x1]
          %2339 = vadd.xlane.f32.xlu0 %v2329
          %v2340 = vpop.xlane.xlu0 %2339
          %2341 = vadd.xlane.f32.xlu0 %v2330
          %v2342 = vpop.xlane.xlu0 %2341
          %v2343 = vmul.f32 %v2340, %v643
          %v2344 = vmul.f32 %v2342, %v643
          %v2345 = vsub.f32 %v2329, %v2343
          %v2346 = vsub.f32 %v2330, %v2344
          %v2347 = vmul.f32 %v2345, %v2345
          %v2348 = vmul.f32 %v2346, %v2346
          %2349 = vadd.xlane.f32.xlu0 %v2347
          %v2350 = vpop.xlane.xlu0 %2349
          %2351 = vadd.xlane.f32.xlu0 %v2348
          %v2352 = vpop.xlane.xlu0 %2351
          %v2353 = vmul.f32 %v2350, %v643
          %v2354 = vmul.f32 %v2352, %v643
          %v2355 = vadd.f32 %v2353, 1e-05
          %v2356 = vadd.f32 %v2354, 1e-05
          %v2357 = vrsqrt.pop %v2355
          %v2358 = vrsqrt.pop %v2356
          %v2359 = vmul.f32 %v2345, %v2357
          %v2360 = vmul.f32 %v2346, %v2358
          %v2361 = vlaneseq
          %v2362 = vshrl.u32 %v2361, 7
          %v2363 = vsub.s32 0, %v2362
          %v2364 = vrot.slane %v2337, %v2363
          %v2365 = vmul.f32 %v2359, %v2364
          %v2366 = vmul.f32 %v2360, %v2364
          %v2367 = vlaneseq
          %v2368 = vshrl.u32 %v2367, 7
          %v2369 = vsub.s32 0, %v2368
          %v2370 = vrot.slane %v2338, %v2369
          %v2371 = vadd.f32 %v2365, %v2370
          %v2372 = vadd.f32 %v2366, %v2370
          %2373 = vst [vmem:[%s558] sm:$0xff] %v2371
          %2374 = vst [vmem:[%s558 + $0x8] sm:$0xff] %v2372
        $region92: #{tpu_custom_call.1} parent=59 // pred_fallthru
          _
        %s2375 = sand.u32 %s286, 1
        %s2376 = scalar_lea.sflag [#allocation5], %s2375
        %s2377 = sand.u32 %s286, 1
        %s2378 = smul.addr %s2377, 16
        %s2379 = scalar_lea.vmem [#allocation12], %s2378
        // Predicated region
        $region93: #{tpu_custom_call.1} parent=59 // pred_check
          %p2380 = pneg %p296
        $region94: #{tpu_custom_call.1} parent=59 // pred_check_branch
          %2382 = sbr.rel (%p2380) target = $region96
        $region95: #{tpu_custom_call.1} parent=59 // pred_region
          %s2383 = smul.u32 2, %s30
          %s2385 = ssub.s32 256, 256
          %2386 = vsyncadd %s2376, %s2385
          %s2387 = smul.addr %s2383, 128
          %s2388 = scalar_lea.hbm %s10, %s2387
          %s2389 = sshll.u32 %s2379, 4
          %s2390 = int_to_ptr.vmem [resolvable:$true] %s2389
          %2395 = dma.vmem_to_hbm [thread:$0]  %s2390, 256, %s2388, %s2376, 128, 128, 8
        $region96: #{tpu_custom_call.1} parent=59 // pred_fallthru
          _
      $region60: #{tpu_custom_call.1} parent=5 // pred_fallthru
        _
      %p2396 = scmp.le.s32.totalorder 2, %s21
      // Predicated region
      $region97: #{tpu_custom_call.1} parent=5 // pred_check
        %p2397 = pneg %p2396
      $region98: #{tpu_custom_call.1} parent=5 // pred_check_branch
        %2399 = sbr.rel (%p2397) target = $region100
      $region99: #{tpu_custom_call.1} parent=5 // pred_region
        %s2400 = ssub.s32 %s21, 2
        // Predicated region
        $region101: #{tpu_custom_call.1} parent=99 // pred_check
          %p2401 = pneg %p302
        $region102: #{tpu_custom_call.1} parent=99 // pred_check_branch
          %2403 = sbr.rel (%p2401) target = $region104
        $region103: #{tpu_custom_call.1} parent=99 // pred_region
          %s2404 = sand.u32 %s287, 1
          %s2405 = scalar_lea.sflag [#allocation5], %s2404
          %s2406 = sand.u32 %s287, 1
          %s2407 = smul.addr %s2406, 16
          %s2408 = scalar_lea.vmem [#allocation12], %s2407
          %2409 = dma.done %s2405, 256
        $region104: #{tpu_custom_call.1} parent=99 // pred_fallthru
          _
      $region100: #{tpu_custom_call.1} parent=5 // pred_fallthru
        _
    $region6: #{tpu_custom_call.1} parent=1 // loop_footer
      %s25 = sadd.s32 1, %s21
    $region7: #{tpu_custom_call.1} parent=1 // loop_footer_branch
      %20 = sbr.rel target = $region3
    $region8: #{tpu_custom_call.1} parent=1 // loop_exit
      _
    %2410 = vsyncpa [#allocation4], 1
    %s2411 = scalar_lea.sflag [#allocation4], 1
    %2412 = vsyncpa %s2411, 1
    %2413 = vsyncpa [#allocation7], 1
    %2414 = vsyncpa [#allocation5], 1
    %s2415 = scalar_lea.sflag [#allocation5], 1
    %2416 = vsyncpa %s2415, 1

</llo_original>
